<compile_context>
chip_gen: v7x
topology: tpu7x:2x2x1
jax: 0.10.0
libtpu: 0.0.40
codegen_flags: <defaults>
</compile_context>

<pallas_src>
import jax
import jax.numpy as jnp
from jax.experimental import pallas as pl
from jax.experimental.pallas import tpu as pltpu


VMEM_LIMIT_BYTES = 48 * 1024 * 1024


# ---------------------------------------------------------------------------
# tiling helper
# ---------------------------------------------------------------------------
def _pick_row_tile(h, batch, bytes_per_row, budget_bytes, min_steps=4):
    """Largest divisor of h that (a) fits the VMEM budget and (b) keeps at least
    `min_steps` total grid steps (megacore sharding / pipelining)."""
    max_rows_mem = max(1, budget_bytes // max(1, bytes_per_row))
    steps_per_batch = max(1, -(-min_steps // max(1, batch)))      # ceil(min_steps/batch)
    max_rows_par = max(1, h // steps_per_batch)
    cap = max(1, min(max_rows_mem, max_rows_par))
    best = 1
    for d in range(1, h + 1):
        if h % d == 0 and d <= cap:
            best = d
    # TODO(synk): prime/odd H degrades to th=1 (correct but slow); a cdiv grid with
    # boundary masking would remove the cliff.
    return best


# ---------------------------------------------------------------------------
# Kernel 1: nearest-neighbour 2x upsample (use_conv=False path).
# Output layout (B, H, 2, W, 2*C) -> reshape to (B, 2H, 2W, C) is zero-copy.
# ---------------------------------------------------------------------------
def _nearest2x_kernel(x_ref, o_ref):
    # x_ref: (1, TH, W, C)   o_ref: (1, TH, 2, W, 2*C)
    x = x_ref[...]
    xx = jnp.concatenate([x, x], axis=-1)                  # (1, TH, W, 2C)
    o_ref[...] = jnp.broadcast_to(xx[:, :, None], o_ref.shape)


def upsample_nearest2x(x_nhwc):
    B, H, W, C = x_nhwc.shape
    item = jnp.dtype(x_nhwc.dtype).itemsize
    # in + out tiles, both double-buffered by the auto-pipeline
    per_row = item * (2 * (W * C) + 2 * (2 * W * 2 * C))
    th = _pick_row_tile(H, B, per_row, 16 * 1024 * 1024)

    out = pl.pallas_call(
        _nearest2x_kernel,
        out_shape=jax.ShapeDtypeStruct((B, H, 2, W, 2 * C), x_nhwc.dtype),
        grid_spec=pltpu.PrefetchScalarGridSpec(
            num_scalar_prefetch=0,
            grid=(B, H // th),
            in_specs=[pl.BlockSpec((1, th, W, C), lambda b, r: (b, r, 0, 0))],
            out_specs=pl.BlockSpec((1, th, 2, W, 2 * C),
                                   lambda b, r: (b, r, 0, 0, 0)),
        ),
        compiler_params=pltpu.CompilerParams(
            dimension_semantics=("parallel", "parallel"),
            vmem_limit_bytes=VMEM_LIMIT_BYTES),
    )(x_nhwc)
    # contiguous (zero-copy) reshape: (B, H, 2, W, 2C) -> (B, 2H, 2W, C)
    return out.reshape(B, 2 * H, 2 * W, C)


# ---------------------------------------------------------------------------
# Kernel 2: fused nearest-2x upsample + 3x3 "same" conv + bias (use_conv=True).
# ---------------------------------------------------------------------------
def _collapse_weights(weight_oihw, dtype):
    """OIHW 3x3 weights -> per-parity collapsed taps on the original image.

    Nearest-2x followed by a 3x3/pad-1 conv collapses, per output parity (a, c)
    in {0,1}^2, into a 2x2-tap conv on the 1-zero-padded original image.
    Returns shape (2, 2, 4*Cin, Cout) indexed [row_parity, col_parity, K, Cout]
    with K ordered [row tap 0: (col tap 0 Cin | col tap 1 Cin) | row tap 1: (...)],
    matching the kernel's K = 4*Cin patch matrices.
    """
    w = jnp.transpose(weight_oihw, (2, 3, 1, 0)).astype(jnp.float32)  # (ky,kx,Cin,Cout)
    # collapse ky:  row parity 0 -> taps (-1, 0);  parity 1 -> taps (0, +1)
    rows = jnp.stack([
        jnp.stack([w[0], w[1] + w[2]]),
        jnp.stack([w[0] + w[1], w[2]]),
    ])                                                     # (2, 2, kx=3, Cin, Cout)
    # collapse kx the same way and concat the 2 column taps along Cin
    col0 = jnp.concatenate([rows[:, :, 0], rows[:, :, 1] + rows[:, :, 2]], axis=-2)
    col1 = jnp.concatenate([rows[:, :, 0] + rows[:, :, 1], rows[:, :, 2]], axis=-2)
    wf = jnp.stack([col0, col1], axis=1)                   # (2, 2, 2, 2*Cin, Cout)
    Cin = weight_oihw.shape[1]
    Cout = weight_oihw.shape[0]
    # fold the two row taps into K (row-tap-major) -> (2, 2, 4*Cin, Cout)
    return wf.astype(dtype).reshape(2, 2, 4 * Cin, Cout)


def _fused_upconv_kernel(xb_ref, xt_ref, xbt_ref, w_ref, b_ref, o_ref):
    # xb_ref : (1, TH, W, Cin)  body row tile (non-overlapping, auto-pipelined)
    # xt_ref : (1, 1, W, Cin)   clamped row above the tile (garbage when r == 0)
    # xbt_ref: (1, 1, W, Cin)   clamped row below the tile (garbage when r == last)
    # w_ref  : (2, 2, 4*Cin, Cout) collapsed weights (grid-invariant, VMEM resident)
    # b_ref  : (1, Cout)
    # o_ref  : (1, TH, 2, W, 2*Cout)
    r = pl.program_id(1)
    n_r = pl.num_programs(1)
    TH = o_ref.shape[1]
    W = o_ref.shape[3]
    Cout = o_ref.shape[4] // 2
    Cin = xb_ref.shape[3]
    dt = xb_ref.dtype

    x = xb_ref[0]                                          # (TH, W, Cin)
    top = xt_ref[0]                                        # (1, W, Cin)
    bot = xbt_ref[0]                                       # (1, W, Cin)
    # image-boundary halo rows are zero (padding=1 on the original image)
    top = jnp.where(r == 0, jnp.zeros_like(top), top)
    bot = jnp.where(r == n_r - 1, jnp.zeros_like(bot), bot)

    xr = jnp.concatenate([top, x, bot], axis=0)            # (TH+2, W, Cin)
    zc = jnp.zeros((TH + 2, 1, Cin), dt)
    xp = jnp.concatenate([zc, xr, zc], axis=1)             # (TH+2, W+2, Cin)  1-padded tile

    # Per column parity c, one slab with both row taps and both column taps
    # concatenated along K (zero-free, K = 4*Cin).  Built once, sliced per row parity.
    g = []
    for c in (0, 1):
        g.append(jnp.concatenate(
            [xp[0:TH + 1, c:c + W], xp[0:TH + 1, c + 1:c + 1 + W],
             xp[1:TH + 2, c:c + W], xp[1:TH + 2, c + 1:c + 1 + W]],
            axis=-1))                                      # (TH+1, W, 4*Cin)

    bias = b_ref[...].astype(jnp.float32)                  # (1, Cout)

    for a in (0, 1):                                       # output row parity
        halves = []
        for c in (0, 1):                                   # output column parity
            p = g[c][a:a + TH].reshape(TH * W, 4 * Cin)
            acc = jnp.dot(p, w_ref[a, c], preferred_element_type=jnp.float32)
            halves.append(acc + bias)
        # lane layout [col-parity 0 channels | col-parity 1 channels]
        y = jnp.concatenate(halves, axis=-1)               # (TH*W, 2*Cout)
        o_ref[0, :, a, :, :] = y.reshape(TH, W, 2 * Cout).astype(o_ref.dtype)


def upsample2x_conv3x3(x_nhwc, weight_oihw, bias):
    """Fused nearest-2x upsample + 3x3 conv (padding=1) + bias. NHWC in/out."""
    B, H, W, Cin = x_nhwc.shape
    Cout = weight_oihw.shape[0]
    dt = x_nhwc.dtype
    item = jnp.dtype(dt).itemsize

    wf = _collapse_weights(weight_oihw, dt)                # (2, 2, 4*Cin, Cout)
    b2 = bias.reshape(1, Cout).astype(jnp.float32)

    # VMEM budget: double-buffered in/out tiles + in-kernel temporaries (+ fixed weights).
    fixed = 2 * 16 * Cin * Cout * item + 4 * Cout
    per_row = (item * (2 * (2 * W * 2 * Cout)              # out tile, double-buffered
                       + 2 * (W * Cin)                     # body tile, double-buffered
                       + (W + 2) * Cin                     # padded tile temp
                       + 2 * (W * 4 * Cin)                 # g0 + g1 slabs
                       + 2 * W * Cout)                     # y staging
               + 4 * (2 * W * Cout))                       # f32 accumulators
    budget = 20 * 1024 * 1024
    th = _pick_row_tile(H, B, per_row, max(per_row, budget - fixed))

    # Halo rows are fetched through clamped index_maps on the *unpadded* input; the
    # content at image boundaries is ignored (zeroed in-kernel), only the index must
    # stay in [0, H).
    idx_body = lambda b, r: (b, r, 0, 0)
    idx_top = lambda b, r: (b, jnp.maximum(r * th - 1, 0), 0, 0)
    idx_bot = lambda b, r: (b, jnp.minimum(r * th + th, H - 1), 0, 0)

    out = pl.pallas_call(
        _fused_upconv_kernel,
        out_shape=jax.ShapeDtypeStruct((B, H, 2, W, 2 * Cout), dt),
        grid_spec=pltpu.PrefetchScalarGridSpec(
            num_scalar_prefetch=0,
            grid=(B, H // th),
            in_specs=[
                pl.BlockSpec((1, th, W, Cin), idx_body),               # body rows
                pl.BlockSpec((1, 1, W, Cin), idx_top),                 # top halo row
                pl.BlockSpec((1, 1, W, Cin), idx_bot),                 # bottom halo row
                pl.BlockSpec((2, 2, 4 * Cin, Cout),
                             lambda b, r: (0, 0, 0, 0)),               # weights (resident)
                pl.BlockSpec((1, Cout), lambda b, r: (0, 0)),          # bias
            ],
            out_specs=pl.BlockSpec((1, th, 2, W, 2 * Cout),
                                   lambda b, r: (b, r, 0, 0, 0)),
        ),
        compiler_params=pltpu.CompilerParams(
            dimension_semantics=("parallel", "parallel"),
            vmem_limit_bytes=VMEM_LIMIT_BYTES),
    )(x_nhwc, x_nhwc, x_nhwc, wf, b2)
    # contiguous (zero-copy) reshape: (B, H, 2, W, 2*Cout) -> (B, 2H, 2W, Cout)
    return out.reshape(B, 2 * H, 2 * W, Cout)


# ---------------------------------------------------------------------------
# Module wrapper (mirrors the PyTorch Upsample module, NCHW interface).
# NHWC-resident models should call upsample_nearest2x / upsample2x_conv3x3
# directly and skip the layout transposes entirely.
# ---------------------------------------------------------------------------
class Upsample:
    def __init__(self, channels, use_conv, dims=2, out_channels=None, padding=1,
                 key=None):
        self.channels = channels
        self.out_channels = out_channels or channels
        self.use_conv = use_conv
        self.dims = dims
        self.padding = padding
        if use_conv:
            assert padding == 1, "only padding=1 ('same' 3x3 conv) implemented"
            if key is None:
                key = jax.random.PRNGKey(0)
            k1, k2 = jax.random.split(key)
            fan_in = channels * 3 * 3
            bound = 1.0 / (fan_in ** 0.5)
            # deterministic synthetic init (Conv2d-style uniform bounds)
            self.weight = jax.random.uniform(
                k1, (self.out_channels, channels, 3, 3), jnp.float32, -bound, bound)
            self.bias = jax.random.uniform(
                k2, (self.out_channels,), jnp.float32, -bound, bound)

    def __call__(self, x):
        assert x.shape[1] == self.channels
        if self.dims == 3:
            assert not self.use_conv, (
                "dims=3 with use_conv applies nn.Conv2d to a 5-D tensor in the "
                "reference, which errors in PyTorch; unsupported here as well")
            # x: (B, C, D, H, W) -> upsample only H, W (matches the reference interpolate)
            B, C, D, H, W = x.shape
            xr = jnp.transpose(x, (0, 2, 3, 4, 1)).reshape(B * D, H, W, C)
            y = upsample_nearest2x(xr).reshape(B, D, 2 * H, 2 * W, C)
            return jnp.transpose(y, (0, 4, 1, 2, 3))

        B, C, H, W = x.shape
        x_nhwc = jnp.transpose(x, (0, 2, 3, 1))
        if self.use_conv:
            y = upsample2x_conv3x3(x_nhwc, self.weight, self.bias)
        else:
            y = upsample_nearest2x(x_nhwc)
        return jnp.transpose(y, (0, 3, 1, 2))              # back to NCHW


if __name__ == "__main__":
    key = jax.random.PRNGKey(0)
    kx, kp = jax.random.split(key)

    B, C, H, W = 2, 4, 16, 16
    x = jax.random.normal(kx, (B, C, H, W), jnp.float32)

    # --- fused upsample + conv path ---
    mod = Upsample(channels=C, use_conv=True, dims=2, key=kp)
    y = jax.block_until_ready(jax.jit(mod.__call__)(x))
    assert y.shape == (B, C, 2 * H, 2 * W), y.shape

    # plain-JAX reference (nearest 2x upsample + 3x3 conv, padding=1)
    x_up = jnp.repeat(jnp.repeat(x, 2, axis=2), 2, axis=3)
    ref = jax.lax.conv_general_dilated(
        x_up, mod.weight, window_strides=(1, 1), padding=((1, 1), (1, 1)),
        dimension_numbers=("NCHW", "OIHW", "NCHW"))
    ref = ref + mod.bias.reshape(1, -1, 1, 1)
    err = float(jnp.max(jnp.abs(y - ref)))
    assert jnp.allclose(y, ref, atol=1e-4, rtol=1e-4), f"conv path max abs err = {err}"

    # --- plain upsample path ---
    mod2 = Upsample(channels=C, use_conv=False, dims=2)
    y2 = jax.block_until_ready(jax.jit(mod2.__call__)(x))
    err2 = float(jnp.max(jnp.abs(y2 - x_up)))
    assert jnp.allclose(y2, x_up), f"upsample path max abs err = {err2}"

    print("KERNEL_OK")
</pallas_src>

<mosaic_0001>
module attributes {stable_mosaic.version = 11 : i64} {
  func.func @_fused_upconv_kernel(%arg0: i32, %arg1: i32, %arg2: memref<1x8x16x4xf32, #tpu.memory_space<vmem>>, %arg3: memref<1x1x16x4xf32, #tpu.memory_space<vmem>>, %arg4: memref<1x1x16x4xf32, #tpu.memory_space<vmem>>, %arg5: memref<2x2x16x4xf32, #tpu.memory_space<vmem>>, %arg6: memref<1x4xf32, #tpu.memory_space<vmem>>, %arg7: memref<1x8x2x16x8xf32, #tpu.memory_space<vmem>>) attributes {dimension_semantics = [#tpu.dimension_semantics<parallel>, #tpu.dimension_semantics<parallel>], iteration_bounds = array<i64: 2, 2>, scalar_prefetch = 0 : i64, scratch_operands = 0 : i64, tpu.core_type = #tpu.core_type<tc>, window_params = [{transform_indices = @transform_0, window_bounds = array<i64: 1, 8, 16, 4>}, {transform_indices = @transform_1, window_bounds = array<i64: 1, 1, 16, 4>}, {transform_indices = @transform_2, window_bounds = array<i64: 1, 1, 16, 4>}, {pipeline_mode = #tpu.pipeline_mode<synchronous>, transform_indices = @transform_3, window_bounds = array<i64: 2, 2, 16, 4>}, {pipeline_mode = #tpu.pipeline_mode<synchronous>, transform_indices = @transform_4, window_bounds = array<i64: 1, 4>}, {transform_indices = @transform_5, window_bounds = array<i64: 1, 8, 2, 16, 8>}]} {
    %c0 = arith.constant 0 : index
    %c0_0 = arith.constant 0 : index
    %c0_1 = arith.constant 0 : index
    %c0_2 = arith.constant 0 : index
    %0 = vector.load %arg2[%c0, %c0_0, %c0_1, %c0_2] : memref<1x8x16x4xf32, #tpu.memory_space<vmem>>, vector<1x8x16x4xf32>
    %1 = vector.shape_cast %0 : vector<1x8x16x4xf32> to vector<8x16x4xf32>
    %c0_3 = arith.constant 0 : index
    %c0_4 = arith.constant 0 : index
    %c0_5 = arith.constant 0 : index
    %c0_6 = arith.constant 0 : index
    %2 = vector.load %arg3[%c0_3, %c0_4, %c0_5, %c0_6] : memref<1x1x16x4xf32, #tpu.memory_space<vmem>>, vector<1x1x16x4xf32>
    %3 = vector.shape_cast %2 : vector<1x1x16x4xf32> to vector<1x16x4xf32>
    %c0_7 = arith.constant 0 : index
    %c0_8 = arith.constant 0 : index
    %c0_9 = arith.constant 0 : index
    %c0_10 = arith.constant 0 : index
    %4 = vector.load %arg4[%c0_7, %c0_8, %c0_9, %c0_10] : memref<1x1x16x4xf32, #tpu.memory_space<vmem>>, vector<1x1x16x4xf32>
    %5 = vector.shape_cast %4 : vector<1x1x16x4xf32> to vector<1x16x4xf32>
    %c0_i32 = arith.constant 0 : i32
    %6 = arith.cmpi eq, %arg1, %c0_i32 : i32
    %cst = arith.constant 0.000000e+00 : f32
    %7 = vector.broadcast %cst : f32 to vector<1x16x4xf32>
    %8 = arith.select %6, %7, %3 : vector<1x16x4xf32>
    %c1_i32 = arith.constant 1 : i32
    %9 = arith.cmpi eq, %arg1, %c1_i32 : i32
    %cst_11 = arith.constant 0.000000e+00 : f32
    %10 = vector.broadcast %cst_11 : f32 to vector<1x16x4xf32>
    %11 = arith.select %9, %10, %5 : vector<1x16x4xf32>
    %12 = tpu.concatenate %8, %1, %11 in 0 : vector<1x16x4xf32>, vector<8x16x4xf32>, vector<1x16x4xf32> -> vector<10x16x4xf32>
    %cst_12 = arith.constant 0.000000e+00 : f32
    %13 = vector.broadcast %cst_12 : f32 to vector<10x1x4xf32>
    %14 = tpu.concatenate %13, %12, %13 in 1 : vector<10x1x4xf32>, vector<10x16x4xf32>, vector<10x1x4xf32> -> vector<10x18x4xf32>
    %15 = vector.extract_strided_slice %14 {offsets = [0, 0, 0], sizes = [9, 16, 4], strides = [1, 1, 1]} : vector<10x18x4xf32> to vector<9x16x4xf32>
    %16 = vector.extract_strided_slice %14 {offsets = [0, 1, 0], sizes = [9, 16, 4], strides = [1, 1, 1]} : vector<10x18x4xf32> to vector<9x16x4xf32>
    %17 = vector.extract_strided_slice %14 {offsets = [1, 0, 0], sizes = [9, 16, 4], strides = [1, 1, 1]} : vector<10x18x4xf32> to vector<9x16x4xf32>
    %18 = vector.extract_strided_slice %14 {offsets = [1, 1, 0], sizes = [9, 16, 4], strides = [1, 1, 1]} : vector<10x18x4xf32> to vector<9x16x4xf32>
    %19 = tpu.concatenate %15, %16, %17, %18 in 2 : vector<9x16x4xf32>, vector<9x16x4xf32>, vector<9x16x4xf32>, vector<9x16x4xf32> -> vector<9x16x16xf32>
    %20 = vector.extract_strided_slice %14 {offsets = [0, 1, 0], sizes = [9, 16, 4], strides = [1, 1, 1]} : vector<10x18x4xf32> to vector<9x16x4xf32>
    %21 = vector.extract_strided_slice %14 {offsets = [0, 2, 0], sizes = [9, 16, 4], strides = [1, 1, 1]} : vector<10x18x4xf32> to vector<9x16x4xf32>
    %22 = vector.extract_strided_slice %14 {offsets = [1, 1, 0], sizes = [9, 16, 4], strides = [1, 1, 1]} : vector<10x18x4xf32> to vector<9x16x4xf32>
    %23 = vector.extract_strided_slice %14 {offsets = [1, 2, 0], sizes = [9, 16, 4], strides = [1, 1, 1]} : vector<10x18x4xf32> to vector<9x16x4xf32>
    %24 = tpu.concatenate %20, %21, %22, %23 in 2 : vector<9x16x4xf32>, vector<9x16x4xf32>, vector<9x16x4xf32>, vector<9x16x4xf32> -> vector<9x16x16xf32>
    %c0_13 = arith.constant 0 : index
    %c0_14 = arith.constant 0 : index
    %25 = vector.load %arg6[%c0_13, %c0_14] : memref<1x4xf32, #tpu.memory_space<vmem>>, vector<1x4xf32>
    %26 = vector.extract_strided_slice %19 {offsets = [0, 0, 0], sizes = [8, 16, 16], strides = [1, 1, 1]} : vector<9x16x16xf32> to vector<8x16x16xf32>
    %27 = vector.shape_cast %26 : vector<8x16x16xf32> to vector<128x16xf32>
    %c0_15 = arith.constant 0 : index
    %c0_16 = arith.constant 0 : index
    %c0_17 = arith.constant 0 : index
    %c0_18 = arith.constant 0 : index
    %28 = vector.load %arg5[%c0_15, %c0_16, %c0_17, %c0_18] : memref<2x2x16x4xf32, #tpu.memory_space<vmem>>, vector<1x1x16x4xf32>
    %29 = vector.shape_cast %28 : vector<1x1x16x4xf32> to vector<16x4xf32>
    %cst_19 = arith.constant dense<0.000000e+00> : vector<128x4xf32>
    %30 = tpu.matmul %27, %29, %cst_19 {dimension_numbers = #tpu.dot_dimension_numbers<[1], [0], [0], [1], [0, 0, 1, 1], [], []>} : vector<128x16xf32>, vector<16x4xf32>, vector<128x4xf32> -> vector<128x4xf32>
    %31 = vector.broadcast %25 : vector<1x4xf32> to vector<128x4xf32>
    %32 = arith.addf %30, %31 : vector<128x4xf32>
    %33 = vector.extract_strided_slice %24 {offsets = [0, 0, 0], sizes = [8, 16, 16], strides = [1, 1, 1]} : vector<9x16x16xf32> to vector<8x16x16xf32>
    %34 = vector.shape_cast %33 : vector<8x16x16xf32> to vector<128x16xf32>
    %c0_20 = arith.constant 0 : index
    %c1 = arith.constant 1 : index
    %c0_21 = arith.constant 0 : index
    %c0_22 = arith.constant 0 : index
    %35 = vector.load %arg5[%c0_20, %c1, %c0_21, %c0_22] : memref<2x2x16x4xf32, #tpu.memory_space<vmem>>, vector<1x1x16x4xf32>
    %36 = vector.shape_cast %35 : vector<1x1x16x4xf32> to vector<16x4xf32>
    %cst_23 = arith.constant dense<0.000000e+00> : vector<128x4xf32>
    %37 = tpu.matmul %34, %36, %cst_23 {dimension_numbers = #tpu.dot_dimension_numbers<[1], [0], [0], [1], [0, 0, 1, 1], [], []>} : vector<128x16xf32>, vector<16x4xf32>, vector<128x4xf32> -> vector<128x4xf32>
    %38 = vector.broadcast %25 : vector<1x4xf32> to vector<128x4xf32>
    %39 = arith.addf %37, %38 : vector<128x4xf32>
    %40 = tpu.concatenate %32, %39 in 1 : vector<128x4xf32>, vector<128x4xf32> -> vector<128x8xf32>
    %41 = vector.shape_cast %40 : vector<128x8xf32> to vector<8x16x8xf32>
    %c0_24 = arith.constant 0 : index
    %c0_25 = arith.constant 0 : index
    %c0_26 = arith.constant 0 : index
    %c0_27 = arith.constant 0 : index
    %c0_28 = arith.constant 0 : index
    %42 = vector.load %arg7[%c0_24, %c0_25, %c0_26, %c0_27, %c0_28] : memref<1x8x2x16x8xf32, #tpu.memory_space<vmem>>, vector<1x8x1x16x8xf32>
    %43 = vector.shape_cast %42 : vector<1x8x1x16x8xf32> to vector<8x16x8xf32>
    %44 = vector.shape_cast %41 : vector<8x16x8xf32> to vector<1x8x1x16x8xf32>
    tpu.vector_store %arg7[%c0_24, %c0_25, %c0_26, %c0_27, %c0_28], %44 {strides = array<i32>} : memref<1x8x2x16x8xf32, #tpu.memory_space<vmem>>, vector<1x8x1x16x8xf32>,
    %45 = vector.extract_strided_slice %19 {offsets = [1, 0, 0], sizes = [8, 16, 16], strides = [1, 1, 1]} : vector<9x16x16xf32> to vector<8x16x16xf32>
    %46 = vector.shape_cast %45 : vector<8x16x16xf32> to vector<128x16xf32>
    %c1_29 = arith.constant 1 : index
    %c0_30 = arith.constant 0 : index
    %c0_31 = arith.constant 0 : index
    %c0_32 = arith.constant 0 : index
    %47 = vector.load %arg5[%c1_29, %c0_30, %c0_31, %c0_32] : memref<2x2x16x4xf32, #tpu.memory_space<vmem>>, vector<1x1x16x4xf32>
    %48 = vector.shape_cast %47 : vector<1x1x16x4xf32> to vector<16x4xf32>
    %cst_33 = arith.constant dense<0.000000e+00> : vector<128x4xf32>
    %49 = tpu.matmul %46, %48, %cst_33 {dimension_numbers = #tpu.dot_dimension_numbers<[1], [0], [0], [1], [0, 0, 1, 1], [], []>} : vector<128x16xf32>, vector<16x4xf32>, vector<128x4xf32> -> vector<128x4xf32>
    %50 = vector.broadcast %25 : vector<1x4xf32> to vector<128x4xf32>
    %51 = arith.addf %49, %50 : vector<128x4xf32>
    %52 = vector.extract_strided_slice %24 {offsets = [1, 0, 0], sizes = [8, 16, 16], strides = [1, 1, 1]} : vector<9x16x16xf32> to vector<8x16x16xf32>
    %53 = vector.shape_cast %52 : vector<8x16x16xf32> to vector<128x16xf32>
    %c1_34 = arith.constant 1 : index
    %c1_35 = arith.constant 1 : index
    %c0_36 = arith.constant 0 : index
    %c0_37 = arith.constant 0 : index
    %54 = vector.load %arg5[%c1_34, %c1_35, %c0_36, %c0_37] : memref<2x2x16x4xf32, #tpu.memory_space<vmem>>, vector<1x1x16x4xf32>
    %55 = vector.shape_cast %54 : vector<1x1x16x4xf32> to vector<16x4xf32>
    %cst_38 = arith.constant dense<0.000000e+00> : vector<128x4xf32>
    %56 = tpu.matmul %53, %55, %cst_38 {dimension_numbers = #tpu.dot_dimension_numbers<[1], [0], [0], [1], [0, 0, 1, 1], [], []>} : vector<128x16xf32>, vector<16x4xf32>, vector<128x4xf32> -> vector<128x4xf32>
    %57 = vector.broadcast %25 : vector<1x4xf32> to vector<128x4xf32>
    %58 = arith.addf %56, %57 : vector<128x4xf32>
    %59 = tpu.concatenate %51, %58 in 1 : vector<128x4xf32>, vector<128x4xf32> -> vector<128x8xf32>
    %60 = vector.shape_cast %59 : vector<128x8xf32> to vector<8x16x8xf32>
    %c0_39 = arith.constant 0 : index
    %c0_40 = arith.constant 0 : index
    %c1_41 = arith.constant 1 : index
    %c0_42 = arith.constant 0 : index
    %c0_43 = arith.constant 0 : index
    %61 = vector.load %arg7[%c0_39, %c0_40, %c1_41, %c0_42, %c0_43] : memref<1x8x2x16x8xf32, #tpu.memory_space<vmem>>, vector<1x8x1x16x8xf32>
    %62 = vector.shape_cast %61 : vector<1x8x1x16x8xf32> to vector<8x16x8xf32>
    %63 = vector.shape_cast %60 : vector<8x16x8xf32> to vector<1x8x1x16x8xf32>
    tpu.vector_store %arg7[%c0_39, %c0_40, %c1_41, %c0_42, %c0_43], %63 {strides = array<i32>} : memref<1x8x2x16x8xf32, #tpu.memory_space<vmem>>, vector<1x8x1x16x8xf32>,
    return
  }
  func.func @transform_0(%arg0: i32, %arg1: i32) -> (i32, i32, i32, i32) {
    %c0_i32 = arith.constant 0 : i32
    %c0_i32_0 = arith.constant 0 : i32
    %c0_i32_1 = arith.constant 0 : i32
    return %arg0, %arg1, %c0_i32, %c0_i32_0 : i32, i32, i32, i32
  }
  func.func @transform_1(%arg0: i32, %arg1: i32) -> (i32, i32, i32, i32) {
    %c8_i32 = arith.constant 8 : i32
    %0 = arith.muli %arg1, %c8_i32 : i32
    %c1_i32 = arith.constant 1 : i32
    %1 = arith.subi %0, %c1_i32 : i32
    %c0_i32 = arith.constant 0 : i32
    %2 = arith.maxsi %1, %c0_i32 : i32
    %c0_i32_0 = arith.constant 0 : i32
    %c0_i32_1 = arith.constant 0 : i32
    %c0_i32_2 = arith.constant 0 : i32
    return %arg0, %2, %c0_i32_0, %c0_i32_1 : i32, i32, i32, i32
  }
  func.func @transform_2(%arg0: i32, %arg1: i32) -> (i32, i32, i32, i32) {
    %c8_i32 = arith.constant 8 : i32
    %0 = arith.muli %arg1, %c8_i32 : i32
    %c8_i32_0 = arith.constant 8 : i32
    %1 = arith.addi %0, %c8_i32_0 : i32
    %c15_i32 = arith.constant 15 : i32
    %2 = arith.minsi %1, %c15_i32 : i32
    %c0_i32 = arith.constant 0 : i32
    %c0_i32_1 = arith.constant 0 : i32
    %c0_i32_2 = arith.constant 0 : i32
    return %arg0, %2, %c0_i32, %c0_i32_1 : i32, i32, i32, i32
  }
  func.func @transform_3(%arg0: i32, %arg1: i32) -> (i32, i32, i32, i32) {
    %c0_i32 = arith.constant 0 : i32
    %c0_i32_0 = arith.constant 0 : i32
    %c0_i32_1 = arith.constant 0 : i32
    %c0_i32_2 = arith.constant 0 : i32
    %c0_i32_3 = arith.constant 0 : i32
    return %c0_i32, %c0_i32_0, %c0_i32_1, %c0_i32_2 : i32, i32, i32, i32
  }
  func.func @transform_4(%arg0: i32, %arg1: i32) -> (i32, i32) {
    %c0_i32 = arith.constant 0 : i32
    %c0_i32_0 = arith.constant 0 : i32
    %c0_i32_1 = arith.constant 0 : i32
    return %c0_i32, %c0_i32_0 : i32, i32
  }
  func.func @transform_5(%arg0: i32, %arg1: i32) -> (i32, i32, i32, i32, i32) {
    %c0_i32 = arith.constant 0 : i32
    %c0_i32_0 = arith.constant 0 : i32
    %c0_i32_1 = arith.constant 0 : i32
    %c0_i32_2 = arith.constant 0 : i32
    return %arg0, %arg1, %c0_i32, %c0_i32_0, %c0_i32_1 : i32, i32, i32, i32, i32
  }
}

</mosaic_0001>

<llo_original>
// kernel: a_call__.1
$region0: #{a_call__.1}
  #allocation0 [shape = 'u32[]', space=smem, size = 0x4, offset = 0x4, fixed_abs, tag = 'smem constant byte address 0x4 - core index']
  #allocation1 [shape = 'u32[144,128]{1,0:T(1,128)}', space=vmem, size = 0x12000, scoped, tag = 'internal scratch']
  %s0 = inlined_call_operand.vmem [shape: f32[2,16,16,4], index: 0, kind: input, shape index: {}, may-alias: {0,1,2}]
  %s1 = inlined_call_operand.vmem [shape: f32[2,16,16,4], index: 1, kind: input, shape index: {}, may-alias: {0,1,2}]
  %s2 = inlined_call_operand.vmem [shape: f32[2,16,16,4], index: 2, kind: input, shape index: {}, may-alias: {0,1,2}]
  %s3 = inlined_call_operand.vmem [shape: f32[2,2,16,4], index: 3, kind: input, shape index: {}]
  %s4 = inlined_call_operand.vmem [shape: f32[1,4], index: 4, kind: input, shape index: {}]
  %s5 = inlined_call_operand.vmem [shape: f32[2,16,2,16,8], index: 5, kind: output, shape index: {}]
  %s6 = sld [smem:[#allocation0]]
  $region53: #{a_call__.1} parent=0
    _
  %s8 = ssub.s32 1, %s6
  %s9 = scalar_select 0, %s8, %s6
  loop: start=0, step=1, limit=6
  $region2: #{a_call__.1} parent=0 // loop_pre_header
    _
  $region3: #{a_call__.1} parent=0 // loop_header
    %s11 = sphi 0, %s15
    %p12 = scmp.ge.s32.totalorder %s11, 6
    %s18 = sphi 0, %s30
    %s19 = sphi 0, %s26
    %s20 = sphi 0, %s18
    %s21 = sphi 0, %s19
    %s22 = sphi 0, %s20
    %s23 = sphi 0, %s21
    %s35 = sphi 0, %s37
    %s38 = sphi 0, %s35
    %s39 = sphi 0, %s38
    %s55 = sphi 0, %s39
    %s71 = sphi 0, %s73
    %s74 = sphi 0, %s71
    %s75 = sphi 0, %s74
    %s91 = sphi 0, %s75
    %s107 = sphi 0, %s109
    %s110 = sphi 0, %s107
    %s111 = sphi 0, %s110
    %s127 = sphi 0, %s111
    %s131 = sphi 0, %s131
    %s133 = sphi 0, %s131
    %s134 = sphi 0, %s133
    %s148 = sphi 0, %s134
    %s152 = sphi 0, %s152
    %s154 = sphi 0, %s152
    %s155 = sphi 0, %s154
    %s169 = sphi 0, %s155
    %s177 = sphi 0, %s179
    %s180 = sphi 0, %s177
    %s181 = sphi 0, %s180
    %s197 = sphi 0, %s181
  $region4: #{a_call__.1} parent=0 // loop_header_branch
    %14 = sbr.rel (%p12) target = $region8
  $region5: #{a_call__.1} parent=0 // loop_body
    %s16 = ssub.s32 %s11, 1
    %s17 = ssub.s32 %s11, 2
    %s24 = sadd.s32 1, %s19
    %p25 = scmp.ge.s32.totalorder %s24, 2
    %s26 = scalar_select %p25, 0, %s24
    %s27 = sadd.s32 1, %s18
    %s28 = scalar_select %p25, %s27, %s18
    %p29 = scmp.ge.s32.totalorder %s28, 2
    %s30 = scalar_select %p29, 0, %s28
    %s31 = ssub.s32 %s18, %s30
    %s32 = ssub.s32 %s19, %s26
    %s33 = sor.u32 %s31, %s32
    %p34 = scmp.eq.s32.totalorder %s33, 0
    %s36 = sadd.s32 %s35, 1
    %s37 = scalar_select %p34, %s35, %s36
    %p40 = pneg %p34
    %p41 = scmp.eq.s32.totalorder %s11, 3
    %p42 = por %p40, %p41
    %p43 = scmp.ne.s32.totalorder %s35, %s38
    %p44 = scmp.eq.s32.totalorder %s11, 0
    %p45 = por %p43, %p44
    %p46 = scmp.ne.s32.totalorder %s35, %s38
    %p47 = scmp.eq.s32.totalorder %s16, 3
    %p48 = por %p46, %p47
    %p49 = scmp.ne.s32.totalorder %s38, %s39
    %p50 = scmp.eq.s32.totalorder %s16, 0
    %p51 = por %p49, %p50
    %p52 = scmp.ne.s32.totalorder %s38, %s39
    %p53 = scmp.eq.s32.totalorder %s17, 3
    %p54 = por %p52, %p53
    %p56 = scmp.ne.s32.totalorder %s39, %s55
    %p57 = scmp.eq.s32.totalorder %s17, 0
    %p58 = por %p56, %p57
    %s59 = smul.u32 %s19, 8
    %s60 = ssub.s32 %s59, 1
    %p61 = scmp.gt.s32.totalorder %s60, 0
    %s62 = scalar_select %p61, %s60, 0
    %s63 = smul.u32 %s26, 8
    %s64 = ssub.s32 %s63, 1
    %p65 = scmp.gt.s32.totalorder %s64, 0
    %s66 = scalar_select %p65, %s64, 0
    %s67 = ssub.s32 %s18, %s30
    %s68 = ssub.s32 %s62, %s66
    %s69 = sor.u32 %s67, %s68
    %p70 = scmp.eq.s32.totalorder %s69, 0
    %s72 = sadd.s32 %s71, 1
    %s73 = scalar_select %p70, %s71, %s72
    %p76 = pneg %p70
    %p77 = scmp.eq.s32.totalorder %s11, 3
    %p78 = por %p76, %p77
    %p79 = scmp.ne.s32.totalorder %s71, %s74
    %p80 = scmp.eq.s32.totalorder %s11, 0
    %p81 = por %p79, %p80
    %p82 = scmp.ne.s32.totalorder %s71, %s74
    %p83 = scmp.eq.s32.totalorder %s16, 3
    %p84 = por %p82, %p83
    %p85 = scmp.ne.s32.totalorder %s74, %s75
    %p86 = scmp.eq.s32.totalorder %s16, 0
    %p87 = por %p85, %p86
    %p88 = scmp.ne.s32.totalorder %s74, %s75
    %p89 = scmp.eq.s32.totalorder %s17, 3
    %p90 = por %p88, %p89
    %p92 = scmp.ne.s32.totalorder %s75, %s91
    %p93 = scmp.eq.s32.totalorder %s17, 0
    %p94 = por %p92, %p93
    %s95 = smul.u32 %s19, 8
    %s96 = sadd.s32 %s95, 8
    %p97 = scmp.lt.s32.totalorder %s96, 15
    %s98 = scalar_select %p97, %s96, 15
    %s99 = smul.u32 %s26, 8
    %s100 = sadd.s32 %s99, 8
    %p101 = scmp.lt.s32.totalorder %s100, 15
    %s102 = scalar_select %p101, %s100, 15
    %s103 = ssub.s32 %s18, %s30
    %s104 = ssub.s32 %s98, %s102
    %s105 = sor.u32 %s103, %s104
    %p106 = scmp.eq.s32.totalorder %s105, 0
    %s108 = sadd.s32 %s107, 1
    %s109 = scalar_select %p106, %s107, %s108
    %p112 = pneg %p106
    %p113 = scmp.eq.s32.totalorder %s11, 3
    %p114 = por %p112, %p113
    %p115 = scmp.ne.s32.totalorder %s107, %s110
    %p116 = scmp.eq.s32.totalorder %s11, 0
    %p117 = por %p115, %p116
    %p118 = scmp.ne.s32.totalorder %s107, %s110
    %p119 = scmp.eq.s32.totalorder %s16, 3
    %p120 = por %p118, %p119
    %p121 = scmp.ne.s32.totalorder %s110, %s111
    %p122 = scmp.eq.s32.totalorder %s16, 0
    %p123 = por %p121, %p122
    %p124 = scmp.ne.s32.totalorder %s110, %s111
    %p125 = scmp.eq.s32.totalorder %s17, 3
    %p126 = por %p124, %p125
    %p128 = scmp.ne.s32.totalorder %s111, %s127
    %p129 = scmp.eq.s32.totalorder %s17, 0
    %p130 = por %p128, %p129
    %s132 = sadd.s32 %s131, 1
    %p135 = scmp.eq.s32.totalorder %s11, 3
    %p136 = scmp.ne.s32.totalorder %s131, %s133
    %p137 = scmp.eq.s32.totalorder %s11, 0
    %p138 = por %p136, %p137
    %p139 = scmp.ne.s32.totalorder %s131, %s133
    %p140 = scmp.eq.s32.totalorder %s16, 3
    %p141 = por %p139, %p140
    %p142 = scmp.ne.s32.totalorder %s133, %s134
    %p143 = scmp.eq.s32.totalorder %s16, 0
    %p144 = por %p142, %p143
    %p145 = scmp.ne.s32.totalorder %s133, %s134
    %p146 = scmp.eq.s32.totalorder %s17, 3
    %p147 = por %p145, %p146
    %p149 = scmp.ne.s32.totalorder %s134, %s148
    %p150 = scmp.eq.s32.totalorder %s17, 0
    %p151 = por %p149, %p150
    %s153 = sadd.s32 %s152, 1
    %p156 = scmp.eq.s32.totalorder %s11, 3
    %p157 = scmp.ne.s32.totalorder %s152, %s154
    %p158 = scmp.eq.s32.totalorder %s11, 0
    %p159 = por %p157, %p158
    %p160 = scmp.ne.s32.totalorder %s152, %s154
    %p161 = scmp.eq.s32.totalorder %s16, 3
    %p162 = por %p160, %p161
    %p163 = scmp.ne.s32.totalorder %s154, %s155
    %p164 = scmp.eq.s32.totalorder %s16, 0
    %p165 = por %p163, %p164
    %p166 = scmp.ne.s32.totalorder %s154, %s155
    %p167 = scmp.eq.s32.totalorder %s17, 3
    %p168 = por %p166, %p167
    %p170 = scmp.ne.s32.totalorder %s155, %s169
    %p171 = scmp.eq.s32.totalorder %s17, 0
    %p172 = por %p170, %p171
    %s173 = ssub.s32 %s18, %s30
    %s174 = ssub.s32 %s19, %s26
    %s175 = sor.u32 %s173, %s174
    %p176 = scmp.eq.s32.totalorder %s175, 0
    %s178 = sadd.s32 %s177, 1
    %s179 = scalar_select %p176, %s177, %s178
    %p182 = pneg %p176
    %p183 = scmp.eq.s32.totalorder %s11, 3
    %p184 = por %p182, %p183
    %p185 = scmp.ne.s32.totalorder %s177, %s180
    %p186 = scmp.eq.s32.totalorder %s11, 0
    %p187 = por %p185, %p186
    %p188 = scmp.ne.s32.totalorder %s177, %s180
    %p189 = scmp.eq.s32.totalorder %s16, 3
    %p190 = por %p188, %p189
    %p191 = scmp.ne.s32.totalorder %s180, %s181
    %p192 = scmp.eq.s32.totalorder %s16, 0
    %p193 = por %p191, %p192
    %p194 = scmp.ne.s32.totalorder %s180, %s181
    %p195 = scmp.eq.s32.totalorder %s17, 3
    %p196 = por %p194, %p195
    %p198 = scmp.ne.s32.totalorder %s181, %s197
    %p199 = scmp.eq.s32.totalorder %s17, 0
    %p200 = por %p198, %p199
    %p201 = scmp.le.s32.totalorder 1, %s11
    %p202 = scmp.lt.s32.totalorder %s11, 5
    %p203 = pnand %p201, %p202
    %p204 = pneg %p203
    // Predicated region
    $region9: #{a_call__.1} parent=5 // pred_check
      _
    $region10: #{a_call__.1} parent=5 // pred_check_branch
      %206 = sbr.rel (%p203) target = $region12
    $region11: #{a_call__.1} parent=5 // pred_region
      %s207 = ssub.s32 %s11, 1
      // Predicated region
      $region13: #{a_call__.1} parent=11 // pred_check
        %p208 = pneg %p144
      $region14: #{a_call__.1} parent=11 // pred_check_branch
        %210 = sbr.rel (%p208) target = $region16
      $region15: #{a_call__.1} parent=11 // pred_region
        _
      $region16: #{a_call__.1} parent=11 // pred_fallthru
        _
      // Predicated region
      $region17: #{a_call__.1} parent=11 // pred_check
        %p211 = pneg %p165
      $region18: #{a_call__.1} parent=11 // pred_check_branch
        %213 = sbr.rel (%p211) target = $region20
      $region19: #{a_call__.1} parent=11 // pred_region
        _
      $region20: #{a_call__.1} parent=11 // pred_fallthru
        _
    $region12: #{a_call__.1} parent=5 // pred_fallthru
      _
    %p214 = scmp.lt.s32.totalorder %s11, 4
    // Predicated region
    $region21: #{a_call__.1} parent=5 // pred_check
      %p215 = pneg %p214
    $region22: #{a_call__.1} parent=5 // pred_check_branch
      %217 = sbr.rel (%p215) target = $region24
    $region23: #{a_call__.1} parent=5 // pred_region
      // Predicated region
      $region25: #{a_call__.1} parent=23 // pred_check
        %p218 = pneg %p45
      $region26: #{a_call__.1} parent=23 // pred_check_branch
        %220 = sbr.rel (%p218) target = $region28
      $region27: #{a_call__.1} parent=23 // pred_region
        %s221 = smul.u32 8, %s19
        %p222 = scmp.lt.s32.totalorder %s18, 1
        %s223 = scalar_select %p222, %s18, 1
        %p224 = scmp.lt.s32.totalorder %s221, 15
        %s225 = scalar_select %p224, %s221, 15
        %s226 = smul.addr %s225, 2
        %s227 = smul.addr %s223, 32
        %s228 = sadd.s32 %s226, %s227
        %s229 = smul.addr %s228, 8
        %s230 = scalar_lea.vmem %s0, %s229
        %s231 = smul.u32 8, %s19
      $region28: #{a_call__.1} parent=23 // pred_fallthru
        _
      // Predicated region
      $region29: #{a_call__.1} parent=23 // pred_check
        %p232 = pneg %p81
      $region30: #{a_call__.1} parent=23 // pred_check_branch
        %234 = sbr.rel (%p232) target = $region32
      $region31: #{a_call__.1} parent=23 // pred_region
        %s235 = smul.u32 %s19, 8
        %s236 = ssub.s32 %s235, 1
        %p237 = scmp.gt.s32.totalorder %s236, 0
        %s238 = scalar_select %p237, %s236, 0
        %p239 = scmp.lt.s32.totalorder %s18, 1
        %s240 = scalar_select %p239, %s18, 1
        %p241 = scmp.lt.s32.totalorder %s238, 15
        %s242 = scalar_select %p241, %s238, 15
        %s243 = smul.addr %s242, 2
        %s244 = smul.addr %s240, 32
        %s245 = sadd.s32 %s243, %s244
        %s246 = smul.addr %s245, 8
        %s247 = scalar_lea.vmem %s1, %s246
        %s248 = smul.u32 %s19, 8
        %s249 = ssub.s32 %s248, 1
        %p250 = scmp.gt.s32.totalorder %s249, 0
        %s251 = scalar_select %p250, %s249, 0
      $region32: #{a_call__.1} parent=23 // pred_fallthru
        _
      // Predicated region
      $region33: #{a_call__.1} parent=23 // pred_check
        %p252 = pneg %p117
      $region34: #{a_call__.1} parent=23 // pred_check_branch
        %254 = sbr.rel (%p252) target = $region36
      $region35: #{a_call__.1} parent=23 // pred_region
        %s255 = smul.u32 %s19, 8
        %s256 = sadd.s32 %s255, 8
        %p257 = scmp.lt.s32.totalorder %s256, 15
        %s258 = scalar_select %p257, %s256, 15
        %p259 = scmp.lt.s32.totalorder %s18, 1
        %s260 = scalar_select %p259, %s18, 1
        %p261 = scmp.lt.s32.totalorder %s258, 15
        %s262 = scalar_select %p261, %s258, 15
        %s263 = smul.addr %s262, 2
        %s264 = smul.addr %s260, 32
        %s265 = sadd.s32 %s263, %s264
        %s266 = smul.addr %s265, 8
        %s267 = scalar_lea.vmem %s2, %s266
        %s268 = smul.u32 %s19, 8
        %s269 = sadd.s32 %s268, 8
        %p270 = scmp.lt.s32.totalorder %s269, 15
        %s271 = scalar_select %p270, %s269, 15
      $region36: #{a_call__.1} parent=23 // pred_fallthru
        _
    $region24: #{a_call__.1} parent=5 // pred_fallthru
      _
    %p272 = scmp.le.s32.totalorder 1, %s11
    %p273 = scmp.lt.s32.totalorder %s11, 5
    %p274 = pnand %p272, %p273
    %p275 = pneg %p274
    // Predicated region
    $region37: #{a_call__.1} parent=5 // pred_check
      _
    $region38: #{a_call__.1} parent=5 // pred_check_branch
      %277 = sbr.rel (%p274) target = $region40
    $region39: #{a_call__.1} parent=5 // pred_region
      %s278 = ssub.s32 %s11, 1
      %s279 = smul.u32 8, %s21
      %p280 = scmp.lt.s32.totalorder %s20, 1
      %s281 = scalar_select %p280, %s20, 1
      %p282 = scmp.lt.s32.totalorder %s279, 15
      %s283 = scalar_select %p282, %s279, 15
      %s284 = smul.addr %s283, 2
      %s285 = smul.addr %s281, 32
      %s286 = sadd.s32 %s284, %s285
      %s287 = smul.addr %s286, 8
      %s288 = scalar_lea.vmem %s0, %s287
      %p289 = pneg %p51
      %p290 = pneg %p48
      %s291 = smul.u32 %s21, 8
      %s292 = ssub.s32 %s291, 1
      %p293 = scmp.gt.s32.totalorder %s292, 0
      %s294 = scalar_select %p293, %s292, 0
      %p295 = scmp.lt.s32.totalorder %s20, 1
      %s296 = scalar_select %p295, %s20, 1
      %p297 = scmp.lt.s32.totalorder %s294, 15
      %s298 = scalar_select %p297, %s294, 15
      %s299 = smul.addr %s298, 2
      %s300 = smul.addr %s296, 32
      %s301 = sadd.s32 %s299, %s300
      %s302 = smul.addr %s301, 8
      %s303 = scalar_lea.vmem %s1, %s302
      %p304 = pneg %p87
      %p305 = pneg %p84
      %s306 = smul.u32 %s21, 8
      %s307 = sadd.s32 %s306, 8
      %p308 = scmp.lt.s32.totalorder %s307, 15
      %s309 = scalar_select %p308, %s307, 15
      %p310 = scmp.lt.s32.totalorder %s20, 1
      %s311 = scalar_select %p310, %s20, 1
      %p312 = scmp.lt.s32.totalorder %s309, 15
      %s313 = scalar_select %p312, %s309, 15
      %s314 = smul.addr %s313, 2
      %s315 = smul.addr %s311, 32
      %s316 = sadd.s32 %s314, %s315
      %s317 = smul.addr %s316, 8
      %s318 = scalar_lea.vmem %s2, %s317
      %p319 = pneg %p123
      %p320 = pneg %p120
      %p321 = pneg %p144
      %p322 = pneg %p141
      %p323 = pneg %p165
      %p324 = pneg %p162
      %p325 = pneg %p193
      %p326 = pneg %p190
      %s327 = smul.u32 8, %s21
      %p328 = scmp.lt.s32.totalorder %s20, 1
      %s329 = scalar_select %p328, %s20, 1
      %p330 = scmp.lt.s32.totalorder %s327, 15
      %s331 = scalar_select %p330, %s327, 15
      %s332 = smul.addr %s331, 4
      %s333 = smul.addr %s329, 64
      %s334 = sadd.s32 %s332, %s333
      %s335 = smul.addr %s334, 8
      %s336 = scalar_lea.vmem %s5, %s335
      %s337 = smul.u32 8, %s21
      %p338 = scmp.lt.s32.totalorder %s20, 1
      %s339 = scalar_select %p338, %s20, 1
      %p340 = scmp.lt.s32.totalorder %s337, 15
      %s341 = scalar_select %p340, %s337, 15
      %s342 = smul.addr %s341, 2
      %s343 = smul.addr %s339, 32
      %s344 = sadd.s32 %s342, %s343
      %s345 = smul.addr %s344, 8
      %s346 = scalar_lea.vmem %s0, %s345
      %s347 = smul.u32 8, %s21
      %s348 = smul.u32 %s21, 8
      %s349 = ssub.s32 %s348, 1
      %p350 = scmp.gt.s32.totalorder %s349, 0
      %s351 = scalar_select %p350, %s349, 0
      %p352 = scmp.lt.s32.totalorder %s20, 1
      %s353 = scalar_select %p352, %s20, 1
      %p354 = scmp.lt.s32.totalorder %s351, 15
      %s355 = scalar_select %p354, %s351, 15
      %s356 = smul.addr %s355, 2
      %s357 = smul.addr %s353, 32
      %s358 = sadd.s32 %s356, %s357
      %s359 = smul.addr %s358, 8
      %s360 = scalar_lea.vmem %s1, %s359
      %s361 = smul.u32 %s21, 8
      %s362 = ssub.s32 %s361, 1
      %p363 = scmp.gt.s32.totalorder %s362, 0
      %s364 = scalar_select %p363, %s362, 0
      %s365 = smul.u32 %s21, 8
      %s366 = sadd.s32 %s365, 8
      %p367 = scmp.lt.s32.totalorder %s366, 15
      %s368 = scalar_select %p367, %s366, 15
      %p369 = scmp.lt.s32.totalorder %s20, 1
      %s370 = scalar_select %p369, %s20, 1
      %p371 = scmp.lt.s32.totalorder %s368, 15
      %s372 = scalar_select %p371, %s368, 15
      %s373 = smul.addr %s372, 2
      %s374 = smul.addr %s370, 32
      %s375 = sadd.s32 %s373, %s374
      %s376 = smul.addr %s375, 8
      %s377 = scalar_lea.vmem %s2, %s376
      %s378 = smul.u32 %s21, 8
      %s379 = sadd.s32 %s378, 8
      %p380 = scmp.lt.s32.totalorder %s379, 15
      %s381 = scalar_select %p380, %s379, 15
      %s382 = smul.u32 8, %s21
      %p383 = scmp.lt.s32.totalorder %s20, 1
      %s384 = scalar_select %p383, %s20, 1
      %p385 = scmp.lt.s32.totalorder %s382, 15
      %s386 = scalar_select %p385, %s382, 15
      %s387 = smul.addr %s386, 4
      %s388 = smul.addr %s384, 64
      %s389 = sadd.s32 %s387, %s388
      %s390 = smul.addr %s389, 8
      %s391 = scalar_lea.vmem %s5, %s390
      %s392 = smul.u32 8, %s21
      %v393 = vld [vmem:[%s346] sm:$0xff]
      %v394 = vld [vmem:[%s346 + $0x8] sm:$0xff]
      %v395 = vld [vmem:[%s346 + $0x10] sm:$0xff]
      %v396 = vld [vmem:[%s346 + $0x18] sm:$0xff]
      %v397 = vld [vmem:[%s346 + $0x20] sm:$0xff]
      %v398 = vld [vmem:[%s346 + $0x28] sm:$0xff]
      %v399 = vld [vmem:[%s346 + $0x30] sm:$0xff]
      %v400 = vld [vmem:[%s346 + $0x38] sm:$0xff]
      %v401 = vld [vmem:[%s346 + $0x40] sm:$0xff]
      %v402 = vld [vmem:[%s346 + $0x48] sm:$0xff]
      %v403 = vld [vmem:[%s346 + $0x50] sm:$0xff]
      %v404 = vld [vmem:[%s346 + $0x58] sm:$0xff]
      %v405 = vld [vmem:[%s346 + $0x60] sm:$0xff]
      %v406 = vld [vmem:[%s346 + $0x68] sm:$0xff]
      %v407 = vld [vmem:[%s346 + $0x70] sm:$0xff]
      %v408 = vld [vmem:[%s346 + $0x78] sm:$0xff]
      %v409 = vld [vmem:[%s360] sm:$0xff]
      %v410 = vld [vmem:[%s360 + $0x8] sm:$0xff]
      %v411 = vld [vmem:[%s377] sm:$0xff]
      %v412 = vld [vmem:[%s377 + $0x8] sm:$0xff]
      %p413 = scmp.eq.s32.totalorder %s21, 0
      %s414 = scalar_select %p413, 1, 0
      %v415 = vstv %s414
      %vm416 = vcmp.eq.s32.totalorder %v415, 1
      %v417 = vsel %vm416, 0.0, %v409
      %v418 = vsel %vm416, 0.0, %v410
      %p419 = scmp.eq.s32.totalorder %s21, 1
      %s420 = scalar_select %p419, 1, 0
      %v421 = vstv %s420
      %vm422 = vcmp.eq.s32.totalorder %v421, 1
      %v423 = vsel %vm422, 0.0, %v411
      %v424 = vsel %vm422, 0.0, %v412
      %vm445 = vcmask 1040384
      %v446 = vrot.slane %v417, 7
      %v447 = vrot.slane %v418, 7
      %v448 = vsel %vm445, %v446, %v447
      %v449 = vrot.slane %v393, 7
      %v450 = vrot.slane %v394, 7
      %v451 = vsel %vm445, %v449, %v450
      %v452 = vrot.slane %v395, 7
      %v453 = vrot.slane %v396, 7
      %v454 = vsel %vm445, %v452, %v453
      %v455 = vrot.slane %v397, 7
      %v456 = vrot.slane %v398, 7
      %v457 = vsel %vm445, %v455, %v456
      %v458 = vrot.slane %v399, 7
      %v459 = vrot.slane %v400, 7
      %v460 = vsel %vm445, %v458, %v459
      %v461 = vrot.slane %v401, 7
      %v462 = vrot.slane %v402, 7
      %v463 = vsel %vm445, %v461, %v462
      %v464 = vrot.slane %v403, 7
      %v465 = vrot.slane %v404, 7
      %v466 = vsel %vm445, %v464, %v465
      %v467 = vrot.slane %v405, 7
      %v468 = vrot.slane %v406, 7
      %v469 = vsel %vm445, %v467, %v468
      %v470 = vrot.slane %v407, 7
      %v471 = vrot.slane %v408, 7
      %v472 = vsel %vm445, %v470, %v471
      %v473 = vrot.slane %v423, 7
      %v474 = vrot.slane %v424, 7
      %v475 = vsel %vm445, %v473, %v474
      %v505 = vsel %vm445, 0.0, %v446
      %v506 = vsel %vm445, 0.0, %v449
      %v507 = vsel %vm445, 0.0, %v452
      %v508 = vsel %vm445, 0.0, %v455
      %v509 = vsel %vm445, 0.0, %v458
      %v510 = vsel %vm445, 0.0, %v461
      %v511 = vsel %vm445, 0.0, %v464
      %v512 = vsel %vm445, 0.0, %v467
      %v513 = vsel %vm445, 0.0, %v470
      %v514 = vsel %vm445, 0.0, %v473
      %v515 = vsel %vm445, %v447, 0.0
      %v516 = vsel %vm445, %v450, 0.0
      %v517 = vsel %vm445, %v453, 0.0
      %v518 = vsel %vm445, %v456, 0.0
      %v519 = vsel %vm445, %v459, 0.0
      %v520 = vsel %vm445, %v462, 0.0
      %v521 = vsel %vm445, %v465, 0.0
      %v522 = vsel %vm445, %v468, 0.0
      %v523 = vsel %vm445, %v471, 0.0
      %v524 = vsel %vm445, %v474, 0.0
      %vm543 = vcmask 1046528
      %v544 = vrot.slane %v505, 1
      %v545 = vrot.slane %v448, 1
      %v546 = vsel %vm543, %v544, %v545
      %v547 = vrot.slane %v515, 1
      %v548 = vsel %vm543, %v545, %v547
      %v549 = vrot.slane %v506, 1
      %v550 = vrot.slane %v451, 1
      %v551 = vsel %vm543, %v549, %v550
      %v552 = vrot.slane %v516, 1
      %v553 = vsel %vm543, %v550, %v552
      %v554 = vrot.slane %v507, 1
      %v555 = vrot.slane %v454, 1
      %v556 = vsel %vm543, %v554, %v555
      %v557 = vrot.slane %v517, 1
      %v558 = vsel %vm543, %v555, %v557
      %v559 = vrot.slane %v508, 1
      %v560 = vrot.slane %v457, 1
      %v561 = vsel %vm543, %v559, %v560
      %v562 = vrot.slane %v518, 1
      %v563 = vsel %vm543, %v560, %v562
      %v564 = vrot.slane %v509, 1
      %v565 = vrot.slane %v460, 1
      %v566 = vsel %vm543, %v564, %v565
      %v567 = vrot.slane %v519, 1
      %v568 = vsel %vm543, %v565, %v567
      %v569 = vrot.slane %v510, 1
      %v570 = vrot.slane %v463, 1
      %v571 = vsel %vm543, %v569, %v570
      %v572 = vrot.slane %v520, 1
      %v573 = vsel %vm543, %v570, %v572
      %v574 = vrot.slane %v511, 1
      %v575 = vrot.slane %v466, 1
      %v576 = vsel %vm543, %v574, %v575
      %v577 = vrot.slane %v521, 1
      %v578 = vsel %vm543, %v575, %v577
      %v579 = vrot.slane %v512, 1
      %v580 = vrot.slane %v469, 1
      %v581 = vsel %vm543, %v579, %v580
      %v582 = vrot.slane %v522, 1
      %v583 = vsel %vm543, %v580, %v582
      %v584 = vrot.slane %v513, 1
      %v585 = vrot.slane %v472, 1
      %v586 = vsel %vm543, %v584, %v585
      %v587 = vrot.slane %v523, 1
      %v588 = vsel %vm543, %v585, %v587
      %589 = vrot.lane.b32.xlu0 %v546, 4
      %v590 = vpop.permute.xlu0 %589
      %591 = vrot.lane.b32.xlu0 %v548, 4
      %v592 = vpop.permute.xlu0 %591
      %593 = vrot.lane.b32.xlu0 %v551, 4
      %v594 = vpop.permute.xlu0 %593
      %595 = vrot.lane.b32.xlu0 %v553, 4
      %v596 = vpop.permute.xlu0 %595
      %597 = vrot.lane.b32.xlu0 %v556, 4
      %v598 = vpop.permute.xlu0 %597
      %599 = vrot.lane.b32.xlu0 %v558, 4
      %v600 = vpop.permute.xlu0 %599
      %601 = vrot.lane.b32.xlu0 %v561, 4
      %v602 = vpop.permute.xlu0 %601
      %603 = vrot.lane.b32.xlu0 %v563, 4
      %v604 = vpop.permute.xlu0 %603
      %605 = vrot.lane.b32.xlu0 %v566, 4
      %v606 = vpop.permute.xlu0 %605
      %607 = vrot.lane.b32.xlu0 %v568, 4
      %v608 = vpop.permute.xlu0 %607
      %609 = vrot.lane.b32.xlu0 %v571, 4
      %v610 = vpop.permute.xlu0 %609
      %611 = vrot.lane.b32.xlu0 %v573, 4
      %v612 = vpop.permute.xlu0 %611
      %613 = vrot.lane.b32.xlu0 %v576, 4
      %v614 = vpop.permute.xlu0 %613
      %615 = vrot.lane.b32.xlu0 %v578, 4
      %v616 = vpop.permute.xlu0 %615
      %617 = vrot.lane.b32.xlu0 %v581, 4
      %v618 = vpop.permute.xlu0 %617
      %619 = vrot.lane.b32.xlu0 %v583, 4
      %v620 = vpop.permute.xlu0 %619
      %621 = vrot.lane.b32.xlu0 %v586, 4
      %v622 = vpop.permute.xlu0 %621
      %623 = vrot.lane.b32.xlu0 %v588, 4
      %v624 = vpop.permute.xlu0 %623
      %644 = vrot.lane.b32.xlu0 %v506, 8
      %v645 = vpop.permute.xlu0 %644
      %646 = vrot.lane.b32.xlu0 %v451, 8
      %v647 = vpop.permute.xlu0 %646
      %648 = vrot.lane.b32.xlu0 %v507, 8
      %v649 = vpop.permute.xlu0 %648
      %650 = vrot.lane.b32.xlu0 %v454, 8
      %v651 = vpop.permute.xlu0 %650
      %652 = vrot.lane.b32.xlu0 %v508, 8
      %v653 = vpop.permute.xlu0 %652
      %654 = vrot.lane.b32.xlu0 %v457, 8
      %v655 = vpop.permute.xlu0 %654
      %656 = vrot.lane.b32.xlu0 %v509, 8
      %v657 = vpop.permute.xlu0 %656
      %658 = vrot.lane.b32.xlu0 %v460, 8
      %v659 = vpop.permute.xlu0 %658
      %660 = vrot.lane.b32.xlu0 %v510, 8
      %v661 = vpop.permute.xlu0 %660
      %662 = vrot.lane.b32.xlu0 %v463, 8
      %v663 = vpop.permute.xlu0 %662
      %664 = vrot.lane.b32.xlu0 %v511, 8
      %v665 = vpop.permute.xlu0 %664
      %666 = vrot.lane.b32.xlu0 %v466, 8
      %v667 = vpop.permute.xlu0 %666
      %668 = vrot.lane.b32.xlu0 %v512, 8
      %v669 = vpop.permute.xlu0 %668
      %670 = vrot.lane.b32.xlu0 %v469, 8
      %v671 = vpop.permute.xlu0 %670
      %672 = vrot.lane.b32.xlu0 %v513, 8
      %v673 = vpop.permute.xlu0 %672
      %674 = vrot.lane.b32.xlu0 %v472, 8
      %v675 = vpop.permute.xlu0 %674
      %676 = vrot.lane.b32.xlu0 %v514, 8
      %v677 = vpop.permute.xlu0 %676
      %678 = vrot.lane.b32.xlu0 %v475, 8
      %v679 = vpop.permute.xlu0 %678
      %v699 = vrot.slane %v514, 1
      %v700 = vrot.slane %v475, 1
      %v701 = vsel %vm543, %v699, %v700
      %v702 = vrot.slane %v524, 1
      %v703 = vsel %vm543, %v700, %v702
      %704 = vrot.lane.b32.xlu0 %v551, 12
      %v705 = vpop.permute.xlu0 %704
      %706 = vrot.lane.b32.xlu0 %v553, 12
      %v707 = vpop.permute.xlu0 %706
      %708 = vrot.lane.b32.xlu0 %v556, 12
      %v709 = vpop.permute.xlu0 %708
      %710 = vrot.lane.b32.xlu0 %v558, 12
      %v711 = vpop.permute.xlu0 %710
      %712 = vrot.lane.b32.xlu0 %v561, 12
      %v713 = vpop.permute.xlu0 %712
      %714 = vrot.lane.b32.xlu0 %v563, 12
      %v715 = vpop.permute.xlu0 %714
      %716 = vrot.lane.b32.xlu0 %v566, 12
      %v717 = vpop.permute.xlu0 %716
      %718 = vrot.lane.b32.xlu0 %v568, 12
      %v719 = vpop.permute.xlu0 %718
      %720 = vrot.lane.b32.xlu0 %v571, 12
      %v721 = vpop.permute.xlu0 %720
      %722 = vrot.lane.b32.xlu0 %v573, 12
      %v723 = vpop.permute.xlu0 %722
      %724 = vrot.lane.b32.xlu0 %v576, 12
      %v725 = vpop.permute.xlu0 %724
      %726 = vrot.lane.b32.xlu0 %v578, 12
      %v727 = vpop.permute.xlu0 %726
      %728 = vrot.lane.b32.xlu0 %v581, 12
      %v729 = vpop.permute.xlu0 %728
      %730 = vrot.lane.b32.xlu0 %v583, 12
      %v731 = vpop.permute.xlu0 %730
      %732 = vrot.lane.b32.xlu0 %v586, 12
      %v733 = vpop.permute.xlu0 %732
      %734 = vrot.lane.b32.xlu0 %v588, 12
      %v735 = vpop.permute.xlu0 %734
      %736 = vrot.lane.b32.xlu0 %v701, 12
      %v737 = vpop.permute.xlu0 %736
      %738 = vrot.lane.b32.xlu0 %v703, 12
      %v739 = vpop.permute.xlu0 %738
      %vm758 = vcmask 31744
      %v759 = vsel %vm758, %v505, %v590
      %v760 = vsel %vm758, %v448, %v592
      %v761 = vsel %vm758, %v506, %v594
      %v762 = vsel %vm758, %v451, %v596
      %v763 = vsel %vm758, %v507, %v598
      %v764 = vsel %vm758, %v454, %v600
      %v765 = vsel %vm758, %v508, %v602
      %v766 = vsel %vm758, %v457, %v604
      %v767 = vsel %vm758, %v509, %v606
      %v768 = vsel %vm758, %v460, %v608
      %v769 = vsel %vm758, %v510, %v610
      %v770 = vsel %vm758, %v463, %v612
      %v771 = vsel %vm758, %v511, %v614
      %v772 = vsel %vm758, %v466, %v616
      %v773 = vsel %vm758, %v512, %v618
      %v774 = vsel %vm758, %v469, %v620
      %v775 = vsel %vm758, %v513, %v622
      %v776 = vsel %vm758, %v472, %v624
      %vm777 = vcmask 64512
      %v778 = vsel %vm777, %v759, %v645
      %v779 = vsel %vm777, %v760, %v647
      %v780 = vsel %vm777, %v761, %v649
      %v781 = vsel %vm777, %v762, %v651
      %v782 = vsel %vm777, %v763, %v653
      %v783 = vsel %vm777, %v764, %v655
      %v784 = vsel %vm777, %v765, %v657
      %v785 = vsel %vm777, %v766, %v659
      %v786 = vsel %vm777, %v767, %v661
      %v787 = vsel %vm777, %v768, %v663
      %v788 = vsel %vm777, %v769, %v665
      %v789 = vsel %vm777, %v770, %v667
      %v790 = vsel %vm777, %v771, %v669
      %v791 = vsel %vm777, %v772, %v671
      %v792 = vsel %vm777, %v773, %v673
      %v793 = vsel %vm777, %v774, %v675
      %v794 = vsel %vm777, %v775, %v677
      %v795 = vsel %vm777, %v776, %v679
      %vm796 = vcmask 97280
      %v797 = vsel %vm796, %v778, %v705
      %v798 = vsel %vm796, %v779, %v707
      %v799 = vsel %vm796, %v780, %v709
      %v800 = vsel %vm796, %v781, %v711
      %v801 = vsel %vm796, %v782, %v713
      %v802 = vsel %vm796, %v783, %v715
      %v803 = vsel %vm796, %v784, %v717
      %v804 = vsel %vm796, %v785, %v719
      %v805 = vsel %vm796, %v786, %v721
      %v806 = vsel %vm796, %v787, %v723
      %v807 = vsel %vm796, %v788, %v725
      %v808 = vsel %vm796, %v789, %v727
      %v809 = vsel %vm796, %v790, %v729
      %v810 = vsel %vm796, %v791, %v731
      %v811 = vsel %vm796, %v792, %v733
      %v812 = vsel %vm796, %v793, %v735
      %v813 = vsel %vm796, %v794, %v737
      %v814 = vsel %vm796, %v795, %v739
      %815 = vrot.lane.b32.xlu0 %v547, 4
      %v816 = vpop.permute.xlu0 %815
      %817 = vrot.lane.b32.xlu0 %v552, 4
      %v818 = vpop.permute.xlu0 %817
      %819 = vrot.lane.b32.xlu0 %v557, 4
      %v820 = vpop.permute.xlu0 %819
      %821 = vrot.lane.b32.xlu0 %v562, 4
      %v822 = vpop.permute.xlu0 %821
      %823 = vrot.lane.b32.xlu0 %v567, 4
      %v824 = vpop.permute.xlu0 %823
      %825 = vrot.lane.b32.xlu0 %v572, 4
      %v826 = vpop.permute.xlu0 %825
      %827 = vrot.lane.b32.xlu0 %v577, 4
      %v828 = vpop.permute.xlu0 %827
      %829 = vrot.lane.b32.xlu0 %v582, 4
      %v830 = vpop.permute.xlu0 %829
      %831 = vrot.lane.b32.xlu0 %v587, 4
      %v832 = vpop.permute.xlu0 %831
      %842 = vrot.lane.b32.xlu0 %v516, 8
      %v843 = vpop.permute.xlu0 %842
      %844 = vrot.lane.b32.xlu0 %v517, 8
      %v845 = vpop.permute.xlu0 %844
      %846 = vrot.lane.b32.xlu0 %v518, 8
      %v847 = vpop.permute.xlu0 %846
      %848 = vrot.lane.b32.xlu0 %v519, 8
      %v849 = vpop.permute.xlu0 %848
      %850 = vrot.lane.b32.xlu0 %v520, 8
      %v851 = vpop.permute.xlu0 %850
      %852 = vrot.lane.b32.xlu0 %v521, 8
      %v853 = vpop.permute.xlu0 %852
      %854 = vrot.lane.b32.xlu0 %v522, 8
      %v855 = vpop.permute.xlu0 %854
      %856 = vrot.lane.b32.xlu0 %v523, 8
      %v857 = vpop.permute.xlu0 %856
      %858 = vrot.lane.b32.xlu0 %v524, 8
      %v859 = vpop.permute.xlu0 %858
      %869 = vrot.lane.b32.xlu0 %v552, 12
      %v870 = vpop.permute.xlu0 %869
      %871 = vrot.lane.b32.xlu0 %v557, 12
      %v872 = vpop.permute.xlu0 %871
      %873 = vrot.lane.b32.xlu0 %v562, 12
      %v874 = vpop.permute.xlu0 %873
      %875 = vrot.lane.b32.xlu0 %v567, 12
      %v876 = vpop.permute.xlu0 %875
      %877 = vrot.lane.b32.xlu0 %v572, 12
      %v878 = vpop.permute.xlu0 %877
      %879 = vrot.lane.b32.xlu0 %v577, 12
      %v880 = vpop.permute.xlu0 %879
      %881 = vrot.lane.b32.xlu0 %v582, 12
      %v882 = vpop.permute.xlu0 %881
      %883 = vrot.lane.b32.xlu0 %v587, 12
      %v884 = vpop.permute.xlu0 %883
      %885 = vrot.lane.b32.xlu0 %v702, 12
      %v886 = vpop.permute.xlu0 %885
      %v896 = vsel %vm758, %v515, %v816
      %v897 = vsel %vm758, %v516, %v818
      %v898 = vsel %vm758, %v517, %v820
      %v899 = vsel %vm758, %v518, %v822
      %v900 = vsel %vm758, %v519, %v824
      %v901 = vsel %vm758, %v520, %v826
      %v902 = vsel %vm758, %v521, %v828
      %v903 = vsel %vm758, %v522, %v830
      %v904 = vsel %vm758, %v523, %v832
      %v905 = vsel %vm777, %v896, %v843
      %v906 = vsel %vm777, %v897, %v845
      %v907 = vsel %vm777, %v898, %v847
      %v908 = vsel %vm777, %v899, %v849
      %v909 = vsel %vm777, %v900, %v851
      %v910 = vsel %vm777, %v901, %v853
      %v911 = vsel %vm777, %v902, %v855
      %v912 = vsel %vm777, %v903, %v857
      %v913 = vsel %vm777, %v904, %v859
      %v914 = vsel %vm796, %v905, %v870
      %v915 = vsel %vm796, %v906, %v872
      %v916 = vsel %vm796, %v907, %v874
      %v917 = vsel %vm796, %v908, %v876
      %v918 = vsel %vm796, %v909, %v878
      %v919 = vsel %vm796, %v910, %v880
      %v920 = vsel %vm796, %v911, %v882
      %v921 = vsel %vm796, %v912, %v884
      %v922 = vsel %vm796, %v913, %v886
      %v923 = vld [vmem:[%s4] sm:$0x1]
      %v924 = vld [vmem:[%s3] sm:$0xff]
      %v925 = vld [vmem:[%s3 + $0x8] sm:$0xff]
      %v927 = vlaneseq
      %v928 = vshrl.u32 %v927, 7
      %v929 = vsub.s32 0, %v928
      %v930 = vrot.slane %v923, %v929
      %vm932 = vcmask 130048
      %v934 = vsel %vm932, %v797, 0
      %v937 = vsel %vm932, %v798, 0
      %v940 = vsel %vm932, %v799, 0
      %v943 = vsel %vm932, %v800, 0
      %v946 = vsel %vm932, %v801, 0
      %v949 = vsel %vm932, %v802, 0
      %v952 = vsel %vm932, %v803, 0
      %v955 = vsel %vm932, %v804, 0
      %v958 = vsel %vm932, %v805, 0
      %v961 = vsel %vm932, %v806, 0
      %v964 = vsel %vm932, %v807, 0
      %v967 = vsel %vm932, %v808, 0
      %v970 = vsel %vm932, %v809, 0
      %v973 = vsel %vm932, %v810, 0
      %v976 = vsel %vm932, %v811, 0
      %v979 = vsel %vm932, %v812, 0
      %981 = vmatprep.subr.mxu0 0.0
      %982 = vmatpush1.msra.mxu0 %v924
      %983 = vmatprep.subr.mxu0 0.0
      %984 = vmatpush1.msra.mxu0 %v925
      %985 = vmatprep.subr.mxu0 0.0
      %986 = vmatpush1.msra.mxu0 0.0
      %987 = vmatprep.subr.mxu0 0.0
      %988 = vmatpush1.msra.mxu0 0.0
      %989 = vmatprep.subr.mxu0 0.0
      %990 = vmatpush1.msra.mxu0 0.0
      %991 = vmatprep.subr.mxu0 0.0
      %992 = vmatpush1.msra.mxu0 0.0
      %993 = vmatprep.subr.mxu0 0.0
      %994 = vmatpush1.msra.mxu0 0.0
      %995 = vmatprep.subr.mxu0 0.0
      %996 = vmatpush1.msra.mxu0 0.0
      %997 = vmatprep.subr.mxu0 0.0
      %998 = vmatpush1.msra.mxu0 0.0
      %999 = vmatprep.subr.mxu0 0.0
      %1000 = vmatpush1.msra.mxu0 0.0
      %1001 = vmatprep.subr.mxu0 0.0
      %1002 = vmatpush1.msra.mxu0 0.0
      %1003 = vmatprep.subr.mxu0 0.0
      %1004 = vmatpush1.msra.mxu0 0.0
      %1005 = vmatprep.subr.mxu0 0.0
      %1006 = vmatpush1.msra.mxu0 0.0
      %1007 = vmatprep.subr.mxu0 0.0
      %1008 = vmatpush1.msra.mxu0 0.0
      %1009 = vmatprep.subr.mxu0 0.0
      %1010 = vmatpush1.msra.mxu0 0.0
      %1011 = vmatprep.subr.mxu0 0.0
      %1012 = vmatpush1.msra.mxu0 0.0
      %1013 = vmatprep.subr.mxu0 0.0
      %1014 = vmatpush1.msra.mxu0 0.0
      %1015 = vmatprep.subr.mxu0 0.0
      %1016 = vmatpush1.msra.mxu0 0.0
      %1017 = vmatprep.subr.mxu0 0.0
      %1018 = vmatpush1.msra.mxu0 0.0
      %1019 = vmatprep.subr.mxu0 0.0
      %1020 = vmatpush1.msra.mxu0 0.0
      %1021 = vmatprep.subr.mxu0 0.0
      %1022 = vmatpush1.msra.mxu0 0.0
      %1023 = vmatprep.subr.mxu0 0.0
      %1024 = vmatpush1.msra.mxu0 0.0
      %1025 = vmatprep.subr.mxu0 0.0
      %1026 = vmatpush1.msra.mxu0 0.0
      %1027 = vmatprep.subr.mxu0 0.0
      %1028 = vmatpush1.msra.mxu0 0.0
      %1029 = vmatprep.subr.mxu0 0.0
      %1030 = vmatpush1.msra.mxu0 0.0
      %1031 = vmatprep.subr.mxu0 0.0
      %1032 = vmatpush1.msra.mxu0 0.0
      %1033 = vmatprep.subr.mxu0 0.0
      %1034 = vmatpush1.msra.mxu0 0.0
      %1035 = vmatprep.subr.mxu0 0.0
      %1036 = vmatpush1.msra.mxu0 0.0
      %1037 = vmatprep.subr.mxu0 0.0
      %1038 = vmatpush1.msra.mxu0 0.0
      %1039 = vmatprep.subr.mxu0 0.0
      %1040 = vmatpush1.msra.mxu0 0.0
      %1041 = vmatprep.subr.mxu0 0.0
      %1042 = vmatpush1.msra.mxu0 0.0
      %1043 = vmatprep.subr.mxu0 0.0
      %1044 = vmatpush1.msra.mxu0 0.0
      %1045 = vmatprep.mubr.f32.mxu0 0.0
      %1046 = vmatmul.mubr.f32.gmra.mrb[0].mxu0 %v934
      %v1047 = vpop.f32.mrb[0].mxu0
      %v1048 = vadd.f32 %v930, %v1047
      %v1049 = vpop.f32.mrb[0].mxu0
      %1050 = vmatprep.mubr.f32.mxu0 0.0
      %1051 = vmatmul.mubr.f32.gmra.mrb[0].mxu0 %v937
      %v1052 = vpop.f32.mrb[0].mxu0
      %v1053 = vadd.f32 %v930, %v1052
      %v1054 = vpop.f32.mrb[0].mxu0
      %1055 = vmatprep.mubr.f32.mxu0 0.0
      %1056 = vmatmul.mubr.f32.gmra.mrb[0].mxu0 %v940
      %v1057 = vpop.f32.mrb[0].mxu0
      %v1058 = vadd.f32 %v930, %v1057
      %v1059 = vpop.f32.mrb[0].mxu0
      %1060 = vmatprep.mubr.f32.mxu0 0.0
      %1061 = vmatmul.mubr.f32.gmra.mrb[0].mxu0 %v943
      %v1062 = vpop.f32.mrb[0].mxu0
      %v1063 = vadd.f32 %v930, %v1062
      %v1064 = vpop.f32.mrb[0].mxu0
      %1065 = vmatprep.mubr.f32.mxu0 0.0
      %1066 = vmatmul.mubr.f32.gmra.mrb[0].mxu0 %v946
      %v1067 = vpop.f32.mrb[0].mxu0
      %v1068 = vadd.f32 %v930, %v1067
      %v1069 = vpop.f32.mrb[0].mxu0
      %1070 = vmatprep.mubr.f32.mxu0 0.0
      %1071 = vmatmul.mubr.f32.gmra.mrb[0].mxu0 %v949
      %v1072 = vpop.f32.mrb[0].mxu0
      %v1073 = vadd.f32 %v930, %v1072
      %v1074 = vpop.f32.mrb[0].mxu0
      %1075 = vmatprep.mubr.f32.mxu0 0.0
      %1076 = vmatmul.mubr.f32.gmra.mrb[0].mxu0 %v952
      %v1077 = vpop.f32.mrb[0].mxu0
      %v1078 = vadd.f32 %v930, %v1077
      %v1079 = vpop.f32.mrb[0].mxu0
      %1080 = vmatprep.mubr.f32.mxu0 0.0
      %1081 = vmatmul.mubr.f32.gmra.mrb[0].mxu0 %v955
      %v1082 = vpop.f32.mrb[0].mxu0
      %v1083 = vadd.f32 %v930, %v1082
      %v1084 = vpop.f32.mrb[0].mxu0
      %1085 = vmatprep.mubr.f32.mxu0 0.0
      %1086 = vmatmul.mubr.f32.gmra.mrb[0].mxu0 %v958
      %v1087 = vpop.f32.mrb[0].mxu0
      %v1088 = vadd.f32 %v930, %v1087
      %v1089 = vpop.f32.mrb[0].mxu0
      %1090 = vmatprep.mubr.f32.mxu0 0.0
      %1091 = vmatmul.mubr.f32.gmra.mrb[0].mxu0 %v961
      %v1092 = vpop.f32.mrb[0].mxu0
      %v1093 = vadd.f32 %v930, %v1092
      %v1094 = vpop.f32.mrb[0].mxu0
      %1095 = vmatprep.mubr.f32.mxu0 0.0
      %1096 = vmatmul.mubr.f32.gmra.mrb[0].mxu0 %v964
      %v1097 = vpop.f32.mrb[0].mxu0
      %v1098 = vadd.f32 %v930, %v1097
      %v1099 = vpop.f32.mrb[0].mxu0
      %1100 = vmatprep.mubr.f32.mxu0 0.0
      %1101 = vmatmul.mubr.f32.gmra.mrb[0].mxu0 %v967
      %v1102 = vpop.f32.mrb[0].mxu0
      %v1103 = vadd.f32 %v930, %v1102
      %v1104 = vpop.f32.mrb[0].mxu0
      %1105 = vmatprep.mubr.f32.mxu0 0.0
      %1106 = vmatmul.mubr.f32.gmra.mrb[0].mxu0 %v970
      %v1107 = vpop.f32.mrb[0].mxu0
      %v1108 = vadd.f32 %v930, %v1107
      %v1109 = vpop.f32.mrb[0].mxu0
      %1110 = vmatprep.mubr.f32.mxu0 0.0
      %1111 = vmatmul.mubr.f32.gmra.mrb[0].mxu0 %v973
      %v1112 = vpop.f32.mrb[0].mxu0
      %v1113 = vadd.f32 %v930, %v1112
      %v1114 = vpop.f32.mrb[0].mxu0
      %1115 = vmatprep.mubr.f32.mxu0 0.0
      %1116 = vmatmul.mubr.f32.gmra.mrb[0].mxu0 %v976
      %v1117 = vpop.f32.mrb[0].mxu0
      %v1118 = vadd.f32 %v930, %v1117
      %v1119 = vpop.f32.mrb[0].mxu0
      %1120 = vmatprep.mubr.f32.mxu0 0.0
      %1121 = vmatmul.mubr.f32.gmra.mrb[0].mxu0 %v979
      %v1122 = vpop.f32.mrb[0].mxu0
      %v1123 = vadd.f32 %v930, %v1122
      %v1124 = vpop.f32.mrb[0].mxu0
      %1125 = vdwg.mxu0
      %v1134 = vrot.slane %v797, 1
      %v1135 = vrot.slane %v798, 1
      %v1136 = vsel %vm543, %v1134, %v1135
      %v1137 = vrot.slane %v914, 1
      %v1138 = vsel %vm543, %v1135, %v1137
      %v1139 = vrot.slane %v799, 1
      %v1140 = vrot.slane %v800, 1
      %v1141 = vsel %vm543, %v1139, %v1140
      %v1142 = vrot.slane %v915, 1
      %v1143 = vsel %vm543, %v1140, %v1142
      %v1144 = vrot.slane %v801, 1
      %v1145 = vrot.slane %v802, 1
      %v1146 = vsel %vm543, %v1144, %v1145
      %v1147 = vrot.slane %v916, 1
      %v1148 = vsel %vm543, %v1145, %v1147
      %v1149 = vrot.slane %v803, 1
      %v1150 = vrot.slane %v804, 1
      %v1151 = vsel %vm543, %v1149, %v1150
      %v1152 = vrot.slane %v917, 1
      %v1153 = vsel %vm543, %v1150, %v1152
      %v1154 = vrot.slane %v805, 1
      %v1155 = vrot.slane %v806, 1
      %v1156 = vsel %vm543, %v1154, %v1155
      %v1157 = vrot.slane %v918, 1
      %v1158 = vsel %vm543, %v1155, %v1157
      %v1159 = vrot.slane %v807, 1
      %v1160 = vrot.slane %v808, 1
      %v1161 = vsel %vm543, %v1159, %v1160
      %v1162 = vrot.slane %v919, 1
      %v1163 = vsel %vm543, %v1160, %v1162
      %v1164 = vrot.slane %v809, 1
      %v1165 = vrot.slane %v810, 1
      %v1166 = vsel %vm543, %v1164, %v1165
      %v1167 = vrot.slane %v920, 1
      %v1168 = vsel %vm543, %v1165, %v1167
      %v1169 = vrot.slane %v811, 1
      %v1170 = vrot.slane %v812, 1
      %v1171 = vsel %vm543, %v1169, %v1170
      %v1172 = vrot.slane %v921, 1
      %v1173 = vsel %vm543, %v1170, %v1172
      %s1174 = scalar_lea.vmem %s3, 16
      %v1175 = vld [vmem:[%s1174] sm:$0xff]
      %v1176 = vld [vmem:[%s1174 + $0x8] sm:$0xff]
      %v1177 = vsel %vm932, %v1136, 0
      %v1179 = vsel %vm932, %v1138, 0
      %v1181 = vsel %vm932, %v1141, 0
      %v1183 = vsel %vm932, %v1143, 0
      %v1185 = vsel %vm932, %v1146, 0
      %v1187 = vsel %vm932, %v1148, 0
      %v1189 = vsel %vm932, %v1151, 0
      %v1191 = vsel %vm932, %v1153, 0
      %v1193 = vsel %vm932, %v1156, 0
      %v1195 = vsel %vm932, %v1158, 0
      %v1197 = vsel %vm932, %v1161, 0
      %v1199 = vsel %vm932, %v1163, 0
      %v1201 = vsel %vm932, %v1166, 0
      %v1203 = vsel %vm932, %v1168, 0
      %v1205 = vsel %vm932, %v1171, 0
      %v1207 = vsel %vm932, %v1173, 0
      %1209 = vmatprep.subr.mxu0 0.0
      %1210 = vmatpush1.msra.mxu0 %v1175
      %1211 = vmatprep.subr.mxu0 0.0
      %1212 = vmatpush1.msra.mxu0 %v1176
      %1213 = vmatprep.subr.mxu0 0.0
      %1214 = vmatpush1.msra.mxu0 0.0
      %1215 = vmatprep.subr.mxu0 0.0
      %1216 = vmatpush1.msra.mxu0 0.0
      %1217 = vmatprep.subr.mxu0 0.0
      %1218 = vmatpush1.msra.mxu0 0.0
      %1219 = vmatprep.subr.mxu0 0.0
      %1220 = vmatpush1.msra.mxu0 0.0
      %1221 = vmatprep.subr.mxu0 0.0
      %1222 = vmatpush1.msra.mxu0 0.0
      %1223 = vmatprep.subr.mxu0 0.0
      %1224 = vmatpush1.msra.mxu0 0.0
      %1225 = vmatprep.subr.mxu0 0.0
      %1226 = vmatpush1.msra.mxu0 0.0
      %1227 = vmatprep.subr.mxu0 0.0
      %1228 = vmatpush1.msra.mxu0 0.0
      %1229 = vmatprep.subr.mxu0 0.0
      %1230 = vmatpush1.msra.mxu0 0.0
      %1231 = vmatprep.subr.mxu0 0.0
      %1232 = vmatpush1.msra.mxu0 0.0
      %1233 = vmatprep.subr.mxu0 0.0
      %1234 = vmatpush1.msra.mxu0 0.0
      %1235 = vmatprep.subr.mxu0 0.0
      %1236 = vmatpush1.msra.mxu0 0.0
      %1237 = vmatprep.subr.mxu0 0.0
      %1238 = vmatpush1.msra.mxu0 0.0
      %1239 = vmatprep.subr.mxu0 0.0
      %1240 = vmatpush1.msra.mxu0 0.0
      %1241 = vmatprep.subr.mxu0 0.0
      %1242 = vmatpush1.msra.mxu0 0.0
      %1243 = vmatprep.subr.mxu0 0.0
      %1244 = vmatpush1.msra.mxu0 0.0
      %1245 = vmatprep.subr.mxu0 0.0
      %1246 = vmatpush1.msra.mxu0 0.0
      %1247 = vmatprep.subr.mxu0 0.0
      %1248 = vmatpush1.msra.mxu0 0.0
      %1249 = vmatprep.subr.mxu0 0.0
      %1250 = vmatpush1.msra.mxu0 0.0
      %1251 = vmatprep.subr.mxu0 0.0
      %1252 = vmatpush1.msra.mxu0 0.0
      %1253 = vmatprep.subr.mxu0 0.0
      %1254 = vmatpush1.msra.mxu0 0.0
      %1255 = vmatprep.subr.mxu0 0.0
      %1256 = vmatpush1.msra.mxu0 0.0
      %1257 = vmatprep.subr.mxu0 0.0
      %1258 = vmatpush1.msra.mxu0 0.0
      %1259 = vmatprep.subr.mxu0 0.0
      %1260 = vmatpush1.msra.mxu0 0.0
      %1261 = vmatprep.subr.mxu0 0.0
      %1262 = vmatpush1.msra.mxu0 0.0
      %1263 = vmatprep.subr.mxu0 0.0
      %1264 = vmatpush1.msra.mxu0 0.0
      %1265 = vmatprep.subr.mxu0 0.0
      %1266 = vmatpush1.msra.mxu0 0.0
      %1267 = vmatprep.subr.mxu0 0.0
      %1268 = vmatpush1.msra.mxu0 0.0
      %1269 = vmatprep.subr.mxu0 0.0
      %1270 = vmatpush1.msra.mxu0 0.0
      %1271 = vmatprep.subr.mxu0 0.0
      %1272 = vmatpush1.msra.mxu0 0.0
      %1273 = vmatprep.mubr.f32.mxu0 0.0
      %1274 = vmatmul.mubr.f32.gmra.mrb[0].mxu0 %v1177
      %v1275 = vpop.f32.mrb[0].mxu0
      %v1276 = vadd.f32 %v930, %v1275
      %v1277 = vpop.f32.mrb[0].mxu0
      %1278 = vmatprep.mubr.f32.mxu0 0.0
      %1279 = vmatmul.mubr.f32.gmra.mrb[0].mxu0 %v1179
      %v1280 = vpop.f32.mrb[0].mxu0
      %v1281 = vadd.f32 %v930, %v1280
      %v1282 = vpop.f32.mrb[0].mxu0
      %1283 = vmatprep.mubr.f32.mxu0 0.0
      %1284 = vmatmul.mubr.f32.gmra.mrb[0].mxu0 %v1181
      %v1285 = vpop.f32.mrb[0].mxu0
      %v1286 = vadd.f32 %v930, %v1285
      %v1287 = vpop.f32.mrb[0].mxu0
      %1288 = vmatprep.mubr.f32.mxu0 0.0
      %1289 = vmatmul.mubr.f32.gmra.mrb[0].mxu0 %v1183
      %v1290 = vpop.f32.mrb[0].mxu0
      %v1291 = vadd.f32 %v930, %v1290
      %v1292 = vpop.f32.mrb[0].mxu0
      %1293 = vmatprep.mubr.f32.mxu0 0.0
      %1294 = vmatmul.mubr.f32.gmra.mrb[0].mxu0 %v1185
      %v1295 = vpop.f32.mrb[0].mxu0
      %v1296 = vadd.f32 %v930, %v1295
      %v1297 = vpop.f32.mrb[0].mxu0
      %1298 = vmatprep.mubr.f32.mxu0 0.0
      %1299 = vmatmul.mubr.f32.gmra.mrb[0].mxu0 %v1187
      %v1300 = vpop.f32.mrb[0].mxu0
      %v1301 = vadd.f32 %v930, %v1300
      %v1302 = vpop.f32.mrb[0].mxu0
      %1303 = vmatprep.mubr.f32.mxu0 0.0
      %1304 = vmatmul.mubr.f32.gmra.mrb[0].mxu0 %v1189
      %v1305 = vpop.f32.mrb[0].mxu0
      %v1306 = vadd.f32 %v930, %v1305
      %v1307 = vpop.f32.mrb[0].mxu0
      %1308 = vmatprep.mubr.f32.mxu0 0.0
      %1309 = vmatmul.mubr.f32.gmra.mrb[0].mxu0 %v1191
      %v1310 = vpop.f32.mrb[0].mxu0
      %v1311 = vadd.f32 %v930, %v1310
      %v1312 = vpop.f32.mrb[0].mxu0
      %1313 = vmatprep.mubr.f32.mxu0 0.0
      %1314 = vmatmul.mubr.f32.gmra.mrb[0].mxu0 %v1193
      %v1315 = vpop.f32.mrb[0].mxu0
      %v1316 = vadd.f32 %v930, %v1315
      %v1317 = vpop.f32.mrb[0].mxu0
      %1318 = vmatprep.mubr.f32.mxu0 0.0
      %1319 = vmatmul.mubr.f32.gmra.mrb[0].mxu0 %v1195
      %v1320 = vpop.f32.mrb[0].mxu0
      %v1321 = vadd.f32 %v930, %v1320
      %v1322 = vpop.f32.mrb[0].mxu0
      %1323 = vmatprep.mubr.f32.mxu0 0.0
      %1324 = vmatmul.mubr.f32.gmra.mrb[0].mxu0 %v1197
      %v1325 = vpop.f32.mrb[0].mxu0
      %v1326 = vadd.f32 %v930, %v1325
      %v1327 = vpop.f32.mrb[0].mxu0
      %1328 = vmatprep.mubr.f32.mxu0 0.0
      %1329 = vmatmul.mubr.f32.gmra.mrb[0].mxu0 %v1199
      %v1330 = vpop.f32.mrb[0].mxu0
      %v1331 = vadd.f32 %v930, %v1330
      %v1332 = vpop.f32.mrb[0].mxu0
      %1333 = vmatprep.mubr.f32.mxu0 0.0
      %1334 = vmatmul.mubr.f32.gmra.mrb[0].mxu0 %v1201
      %v1335 = vpop.f32.mrb[0].mxu0
      %v1336 = vadd.f32 %v930, %v1335
      %v1337 = vpop.f32.mrb[0].mxu0
      %1338 = vmatprep.mubr.f32.mxu0 0.0
      %1339 = vmatmul.mubr.f32.gmra.mrb[0].mxu0 %v1203
      %v1340 = vpop.f32.mrb[0].mxu0
      %v1341 = vadd.f32 %v930, %v1340
      %v1342 = vpop.f32.mrb[0].mxu0
      %1343 = vmatprep.mubr.f32.mxu0 0.0
      %1344 = vmatmul.mubr.f32.gmra.mrb[0].mxu0 %v1205
      %v1345 = vpop.f32.mrb[0].mxu0
      %v1346 = vadd.f32 %v930, %v1345
      %v1347 = vpop.f32.mrb[0].mxu0
      %1348 = vmatprep.mubr.f32.mxu0 0.0
      %1349 = vmatmul.mubr.f32.gmra.mrb[0].mxu0 %v1207
      %v1350 = vpop.f32.mrb[0].mxu0
      %v1351 = vadd.f32 %v930, %v1350
      %v1352 = vpop.f32.mrb[0].mxu0
      %1353 = vdwg.mxu0
      %1370 = vrot.lane.b32.xlu0 %v1276, 4
      %v1371 = vpop.permute.xlu0 %1370
      %1372 = vrot.lane.b32.xlu0 %v1281, 4
      %v1373 = vpop.permute.xlu0 %1372
      %1374 = vrot.lane.b32.xlu0 %v1286, 4
      %v1375 = vpop.permute.xlu0 %1374
      %1376 = vrot.lane.b32.xlu0 %v1291, 4
      %v1377 = vpop.permute.xlu0 %1376
      %1378 = vrot.lane.b32.xlu0 %v1296, 4
      %v1379 = vpop.permute.xlu0 %1378
      %1380 = vrot.lane.b32.xlu0 %v1301, 4
      %v1381 = vpop.permute.xlu0 %1380
      %1382 = vrot.lane.b32.xlu0 %v1306, 4
      %v1383 = vpop.permute.xlu0 %1382
      %1384 = vrot.lane.b32.xlu0 %v1311, 4
      %v1385 = vpop.permute.xlu0 %1384
      %1386 = vrot.lane.b32.xlu0 %v1316, 4
      %v1387 = vpop.permute.xlu0 %1386
      %1388 = vrot.lane.b32.xlu0 %v1321, 4
      %v1389 = vpop.permute.xlu0 %1388
      %1390 = vrot.lane.b32.xlu0 %v1326, 4
      %v1391 = vpop.permute.xlu0 %1390
      %1392 = vrot.lane.b32.xlu0 %v1331, 4
      %v1393 = vpop.permute.xlu0 %1392
      %1394 = vrot.lane.b32.xlu0 %v1336, 4
      %v1395 = vpop.permute.xlu0 %1394
      %1396 = vrot.lane.b32.xlu0 %v1341, 4
      %v1397 = vpop.permute.xlu0 %1396
      %1398 = vrot.lane.b32.xlu0 %v1346, 4
      %v1399 = vpop.permute.xlu0 %1398
      %1400 = vrot.lane.b32.xlu0 %v1351, 4
      %v1401 = vpop.permute.xlu0 %1400
      %v1418 = vsel %vm758, %v1048, %v1371
      %v1419 = vsel %vm758, %v1053, %v1373
      %v1420 = vsel %vm758, %v1058, %v1375
      %v1421 = vsel %vm758, %v1063, %v1377
      %v1422 = vsel %vm758, %v1068, %v1379
      %v1423 = vsel %vm758, %v1073, %v1381
      %v1424 = vsel %vm758, %v1078, %v1383
      %v1425 = vsel %vm758, %v1083, %v1385
      %v1426 = vsel %vm758, %v1088, %v1387
      %v1427 = vsel %vm758, %v1093, %v1389
      %v1428 = vsel %vm758, %v1098, %v1391
      %v1429 = vsel %vm758, %v1103, %v1393
      %v1430 = vsel %vm758, %v1108, %v1395
      %v1431 = vsel %vm758, %v1113, %v1397
      %v1432 = vsel %vm758, %v1118, %v1399
      %v1433 = vsel %vm758, %v1123, %v1401
      %1434 = vst.msk [vmem:[%s391] sm:$0xff] %vm777, %v1418
      %1435 = vst.msk [vmem:[%s391 + $0x8] sm:$0xff] %vm777, %v1419
      %1436 = vst.msk [vmem:[%s391 + $0x20] sm:$0xff] %vm777, %v1420
      %1437 = vst.msk [vmem:[%s391 + $0x28] sm:$0xff] %vm777, %v1421
      %1438 = vst.msk [vmem:[%s391 + $0x40] sm:$0xff] %vm777, %v1422
      %1439 = vst.msk [vmem:[%s391 + $0x48] sm:$0xff] %vm777, %v1423
      %1440 = vst.msk [vmem:[%s391 + $0x60] sm:$0xff] %vm777, %v1424
      %1441 = vst.msk [vmem:[%s391 + $0x68] sm:$0xff] %vm777, %v1425
      %1442 = vst.msk [vmem:[%s391 + $0x80] sm:$0xff] %vm777, %v1426
      %1443 = vst.msk [vmem:[%s391 + $0x88] sm:$0xff] %vm777, %v1427
      %1444 = vst.msk [vmem:[%s391 + $0xa0] sm:$0xff] %vm777, %v1428
      %1445 = vst.msk [vmem:[%s391 + $0xa8] sm:$0xff] %vm777, %v1429
      %1446 = vst.msk [vmem:[%s391 + $0xc0] sm:$0xff] %vm777, %v1430
      %1447 = vst.msk [vmem:[%s391 + $0xc8] sm:$0xff] %vm777, %v1431
      %1448 = vst.msk [vmem:[%s391 + $0xe0] sm:$0xff] %vm777, %v1432
      %1449 = vst.msk [vmem:[%s391 + $0xe8] sm:$0xff] %vm777, %v1433
      %s1450 = scalar_lea.vmem %s3, 32
      %v1451 = vld [vmem:[%s1450] sm:$0xff]
      %v1452 = vld [vmem:[%s1450 + $0x8] sm:$0xff]
      %v1454 = vsel %vm932, %v813, 0
      %v1457 = vsel %vm932, %v814, 0
      %1459 = vmatprep.subr.mxu0 0.0
      %1460 = vmatpush1.msra.mxu0 %v1451
      %1461 = vmatprep.subr.mxu0 0.0
      %1462 = vmatpush1.msra.mxu0 %v1452
      %1463 = vmatprep.subr.mxu0 0.0
      %1464 = vmatpush1.msra.mxu0 0.0
      %1465 = vmatprep.subr.mxu0 0.0
      %1466 = vmatpush1.msra.mxu0 0.0
      %1467 = vmatprep.subr.mxu0 0.0
      %1468 = vmatpush1.msra.mxu0 0.0
      %1469 = vmatprep.subr.mxu0 0.0
      %1470 = vmatpush1.msra.mxu0 0.0
      %1471 = vmatprep.subr.mxu0 0.0
      %1472 = vmatpush1.msra.mxu0 0.0
      %1473 = vmatprep.subr.mxu0 0.0
      %1474 = vmatpush1.msra.mxu0 0.0
      %1475 = vmatprep.subr.mxu0 0.0
      %1476 = vmatpush1.msra.mxu0 0.0
      %1477 = vmatprep.subr.mxu0 0.0
      %1478 = vmatpush1.msra.mxu0 0.0
      %1479 = vmatprep.subr.mxu0 0.0
      %1480 = vmatpush1.msra.mxu0 0.0
      %1481 = vmatprep.subr.mxu0 0.0
      %1482 = vmatpush1.msra.mxu0 0.0
      %1483 = vmatprep.subr.mxu0 0.0
      %1484 = vmatpush1.msra.mxu0 0.0
      %1485 = vmatprep.subr.mxu0 0.0
      %1486 = vmatpush1.msra.mxu0 0.0
      %1487 = vmatprep.subr.mxu0 0.0
      %1488 = vmatpush1.msra.mxu0 0.0
      %1489 = vmatprep.subr.mxu0 0.0
      %1490 = vmatpush1.msra.mxu0 0.0
      %1491 = vmatprep.subr.mxu0 0.0
      %1492 = vmatpush1.msra.mxu0 0.0
      %1493 = vmatprep.subr.mxu0 0.0
      %1494 = vmatpush1.msra.mxu0 0.0
      %1495 = vmatprep.subr.mxu0 0.0
      %1496 = vmatpush1.msra.mxu0 0.0
      %1497 = vmatprep.subr.mxu0 0.0
      %1498 = vmatpush1.msra.mxu0 0.0
      %1499 = vmatprep.subr.mxu0 0.0
      %1500 = vmatpush1.msra.mxu0 0.0
      %1501 = vmatprep.subr.mxu0 0.0
      %1502 = vmatpush1.msra.mxu0 0.0
      %1503 = vmatprep.subr.mxu0 0.0
      %1504 = vmatpush1.msra.mxu0 0.0
      %1505 = vmatprep.subr.mxu0 0.0
      %1506 = vmatpush1.msra.mxu0 0.0
      %1507 = vmatprep.subr.mxu0 0.0
      %1508 = vmatpush1.msra.mxu0 0.0
      %1509 = vmatprep.subr.mxu0 0.0
      %1510 = vmatpush1.msra.mxu0 0.0
      %1511 = vmatprep.subr.mxu0 0.0
      %1512 = vmatpush1.msra.mxu0 0.0
      %1513 = vmatprep.subr.mxu0 0.0
      %1514 = vmatpush1.msra.mxu0 0.0
      %1515 = vmatprep.subr.mxu0 0.0
      %1516 = vmatpush1.msra.mxu0 0.0
      %1517 = vmatprep.subr.mxu0 0.0
      %1518 = vmatpush1.msra.mxu0 0.0
      %1519 = vmatprep.subr.mxu0 0.0
      %1520 = vmatpush1.msra.mxu0 0.0
      %1521 = vmatprep.subr.mxu0 0.0
      %1522 = vmatpush1.msra.mxu0 0.0
      %1523 = vmatprep.mubr.f32.mxu0 0.0
      %1524 = vmatmul.mubr.f32.gmra.mrb[0].mxu0 %v940
      %v1525 = vpop.f32.mrb[0].mxu0
      %v1526 = vadd.f32 %v930, %v1525
      %v1527 = vpop.f32.mrb[0].mxu0
      %1528 = vmatprep.mubr.f32.mxu0 0.0
      %1529 = vmatmul.mubr.f32.gmra.mrb[0].mxu0 %v943
      %v1530 = vpop.f32.mrb[0].mxu0
      %v1531 = vadd.f32 %v930, %v1530
      %v1532 = vpop.f32.mrb[0].mxu0
      %1533 = vmatprep.mubr.f32.mxu0 0.0
      %1534 = vmatmul.mubr.f32.gmra.mrb[0].mxu0 %v946
      %v1535 = vpop.f32.mrb[0].mxu0
      %v1536 = vadd.f32 %v930, %v1535
      %v1537 = vpop.f32.mrb[0].mxu0
      %1538 = vmatprep.mubr.f32.mxu0 0.0
      %1539 = vmatmul.mubr.f32.gmra.mrb[0].mxu0 %v949
      %v1540 = vpop.f32.mrb[0].mxu0
      %v1541 = vadd.f32 %v930, %v1540
      %v1542 = vpop.f32.mrb[0].mxu0
      %1543 = vmatprep.mubr.f32.mxu0 0.0
      %1544 = vmatmul.mubr.f32.gmra.mrb[0].mxu0 %v952
      %v1545 = vpop.f32.mrb[0].mxu0
      %v1546 = vadd.f32 %v930, %v1545
      %v1547 = vpop.f32.mrb[0].mxu0
      %1548 = vmatprep.mubr.f32.mxu0 0.0
      %1549 = vmatmul.mubr.f32.gmra.mrb[0].mxu0 %v955
      %v1550 = vpop.f32.mrb[0].mxu0
      %v1551 = vadd.f32 %v930, %v1550
      %v1552 = vpop.f32.mrb[0].mxu0
      %1553 = vmatprep.mubr.f32.mxu0 0.0
      %1554 = vmatmul.mubr.f32.gmra.mrb[0].mxu0 %v958
      %v1555 = vpop.f32.mrb[0].mxu0
      %v1556 = vadd.f32 %v930, %v1555
      %v1557 = vpop.f32.mrb[0].mxu0
      %1558 = vmatprep.mubr.f32.mxu0 0.0
      %1559 = vmatmul.mubr.f32.gmra.mrb[0].mxu0 %v961
      %v1560 = vpop.f32.mrb[0].mxu0
      %v1561 = vadd.f32 %v930, %v1560
      %v1562 = vpop.f32.mrb[0].mxu0
      %1563 = vmatprep.mubr.f32.mxu0 0.0
      %1564 = vmatmul.mubr.f32.gmra.mrb[0].mxu0 %v964
      %v1565 = vpop.f32.mrb[0].mxu0
      %v1566 = vadd.f32 %v930, %v1565
      %v1567 = vpop.f32.mrb[0].mxu0
      %1568 = vmatprep.mubr.f32.mxu0 0.0
      %1569 = vmatmul.mubr.f32.gmra.mrb[0].mxu0 %v967
      %v1570 = vpop.f32.mrb[0].mxu0
      %v1571 = vadd.f32 %v930, %v1570
      %v1572 = vpop.f32.mrb[0].mxu0
      %1573 = vmatprep.mubr.f32.mxu0 0.0
      %1574 = vmatmul.mubr.f32.gmra.mrb[0].mxu0 %v970
      %v1575 = vpop.f32.mrb[0].mxu0
      %v1576 = vadd.f32 %v930, %v1575
      %v1577 = vpop.f32.mrb[0].mxu0
      %1578 = vmatprep.mubr.f32.mxu0 0.0
      %1579 = vmatmul.mubr.f32.gmra.mrb[0].mxu0 %v973
      %v1580 = vpop.f32.mrb[0].mxu0
      %v1581 = vadd.f32 %v930, %v1580
      %v1582 = vpop.f32.mrb[0].mxu0
      %1583 = vmatprep.mubr.f32.mxu0 0.0
      %1584 = vmatmul.mubr.f32.gmra.mrb[0].mxu0 %v976
      %v1585 = vpop.f32.mrb[0].mxu0
      %v1586 = vadd.f32 %v930, %v1585
      %v1587 = vpop.f32.mrb[0].mxu0
      %1588 = vmatprep.mubr.f32.mxu0 0.0
      %1589 = vmatmul.mubr.f32.gmra.mrb[0].mxu0 %v979
      %v1590 = vpop.f32.mrb[0].mxu0
      %v1591 = vadd.f32 %v930, %v1590
      %v1592 = vpop.f32.mrb[0].mxu0
      %1593 = vmatprep.mubr.f32.mxu0 0.0
      %1594 = vmatmul.mubr.f32.gmra.mrb[0].mxu0 %v1454
      %v1595 = vpop.f32.mrb[0].mxu0
      %v1596 = vadd.f32 %v930, %v1595
      %v1597 = vpop.f32.mrb[0].mxu0
      %1598 = vmatprep.mubr.f32.mxu0 0.0
      %1599 = vmatmul.mubr.f32.gmra.mrb[0].mxu0 %v1457
      %v1600 = vpop.f32.mrb[0].mxu0
      %v1601 = vadd.f32 %v930, %v1600
      %v1602 = vpop.f32.mrb[0].mxu0
      %1603 = vdwg.mxu0
      %v1605 = vrot.slane %v813, 1
      %v1606 = vrot.slane %v814, 1
      %v1607 = vsel %vm543, %v1605, %v1606
      %v1608 = vrot.slane %v922, 1
      %v1609 = vsel %vm543, %v1606, %v1608
      %s1610 = scalar_lea.vmem %s3, 48
      %v1611 = vld [vmem:[%s1610] sm:$0xff]
      %v1612 = vld [vmem:[%s1610 + $0x8] sm:$0xff]
      %v1613 = vsel %vm932, %v1607, 0
      %v1615 = vsel %vm932, %v1609, 0
      %1617 = vmatprep.subr.mxu0 0.0
      %1618 = vmatpush1.msra.mxu0 %v1611
      %1619 = vmatprep.subr.mxu0 0.0
      %1620 = vmatpush1.msra.mxu0 %v1612
      %1621 = vmatprep.subr.mxu0 0.0
      %1622 = vmatpush1.msra.mxu0 0.0
      %1623 = vmatprep.subr.mxu0 0.0
      %1624 = vmatpush1.msra.mxu0 0.0
      %1625 = vmatprep.subr.mxu0 0.0
      %1626 = vmatpush1.msra.mxu0 0.0
      %1627 = vmatprep.subr.mxu0 0.0
      %1628 = vmatpush1.msra.mxu0 0.0
      %1629 = vmatprep.subr.mxu0 0.0
      %1630 = vmatpush1.msra.mxu0 0.0
      %1631 = vmatprep.subr.mxu0 0.0
      %1632 = vmatpush1.msra.mxu0 0.0
      %1633 = vmatprep.subr.mxu0 0.0
      %1634 = vmatpush1.msra.mxu0 0.0
      %1635 = vmatprep.subr.mxu0 0.0
      %1636 = vmatpush1.msra.mxu0 0.0
      %1637 = vmatprep.subr.mxu0 0.0
      %1638 = vmatpush1.msra.mxu0 0.0
      %1639 = vmatprep.subr.mxu0 0.0
      %1640 = vmatpush1.msra.mxu0 0.0
      %1641 = vmatprep.subr.mxu0 0.0
      %1642 = vmatpush1.msra.mxu0 0.0
      %1643 = vmatprep.subr.mxu0 0.0
      %1644 = vmatpush1.msra.mxu0 0.0
      %1645 = vmatprep.subr.mxu0 0.0
      %1646 = vmatpush1.msra.mxu0 0.0
      %1647 = vmatprep.subr.mxu0 0.0
      %1648 = vmatpush1.msra.mxu0 0.0
      %1649 = vmatprep.subr.mxu0 0.0
      %1650 = vmatpush1.msra.mxu0 0.0
      %1651 = vmatprep.subr.mxu0 0.0
      %1652 = vmatpush1.msra.mxu0 0.0
      %1653 = vmatprep.subr.mxu0 0.0
      %1654 = vmatpush1.msra.mxu0 0.0
      %1655 = vmatprep.subr.mxu0 0.0
      %1656 = vmatpush1.msra.mxu0 0.0
      %1657 = vmatprep.subr.mxu0 0.0
      %1658 = vmatpush1.msra.mxu0 0.0
      %1659 = vmatprep.subr.mxu0 0.0
      %1660 = vmatpush1.msra.mxu0 0.0
      %1661 = vmatprep.subr.mxu0 0.0
      %1662 = vmatpush1.msra.mxu0 0.0
      %1663 = vmatprep.subr.mxu0 0.0
      %1664 = vmatpush1.msra.mxu0 0.0
      %1665 = vmatprep.subr.mxu0 0.0
      %1666 = vmatpush1.msra.mxu0 0.0
      %1667 = vmatprep.subr.mxu0 0.0
      %1668 = vmatpush1.msra.mxu0 0.0
      %1669 = vmatprep.subr.mxu0 0.0
      %1670 = vmatpush1.msra.mxu0 0.0
      %1671 = vmatprep.subr.mxu0 0.0
      %1672 = vmatpush1.msra.mxu0 0.0
      %1673 = vmatprep.subr.mxu0 0.0
      %1674 = vmatpush1.msra.mxu0 0.0
      %1675 = vmatprep.subr.mxu0 0.0
      %1676 = vmatpush1.msra.mxu0 0.0
      %1677 = vmatprep.subr.mxu0 0.0
      %1678 = vmatpush1.msra.mxu0 0.0
      %1679 = vmatprep.subr.mxu0 0.0
      %1680 = vmatpush1.msra.mxu0 0.0
      %1681 = vmatprep.mubr.f32.mxu0 0.0
      %1682 = vmatmul.mubr.f32.gmra.mrb[0].mxu0 %v1181
      %v1683 = vpop.f32.mrb[0].mxu0
      %v1684 = vadd.f32 %v930, %v1683
      %v1685 = vpop.f32.mrb[0].mxu0
      %1686 = vmatprep.mubr.f32.mxu0 0.0
      %1687 = vmatmul.mubr.f32.gmra.mrb[0].mxu0 %v1183
      %v1688 = vpop.f32.mrb[0].mxu0
      %v1689 = vadd.f32 %v930, %v1688
      %v1690 = vpop.f32.mrb[0].mxu0
      %1691 = vmatprep.mubr.f32.mxu0 0.0
      %1692 = vmatmul.mubr.f32.gmra.mrb[0].mxu0 %v1185
      %v1693 = vpop.f32.mrb[0].mxu0
      %v1694 = vadd.f32 %v930, %v1693
      %v1695 = vpop.f32.mrb[0].mxu0
      %1696 = vmatprep.mubr.f32.mxu0 0.0
      %1697 = vmatmul.mubr.f32.gmra.mrb[0].mxu0 %v1187
      %v1698 = vpop.f32.mrb[0].mxu0
      %v1699 = vadd.f32 %v930, %v1698
      %v1700 = vpop.f32.mrb[0].mxu0
      %1701 = vmatprep.mubr.f32.mxu0 0.0
      %1702 = vmatmul.mubr.f32.gmra.mrb[0].mxu0 %v1189
      %v1703 = vpop.f32.mrb[0].mxu0
      %v1704 = vadd.f32 %v930, %v1703
      %v1705 = vpop.f32.mrb[0].mxu0
      %1706 = vmatprep.mubr.f32.mxu0 0.0
      %1707 = vmatmul.mubr.f32.gmra.mrb[0].mxu0 %v1191
      %v1708 = vpop.f32.mrb[0].mxu0
      %v1709 = vadd.f32 %v930, %v1708
      %v1710 = vpop.f32.mrb[0].mxu0
      %1711 = vmatprep.mubr.f32.mxu0 0.0
      %1712 = vmatmul.mubr.f32.gmra.mrb[0].mxu0 %v1193
      %v1713 = vpop.f32.mrb[0].mxu0
      %v1714 = vadd.f32 %v930, %v1713
      %v1715 = vpop.f32.mrb[0].mxu0
      %1716 = vmatprep.mubr.f32.mxu0 0.0
      %1717 = vmatmul.mubr.f32.gmra.mrb[0].mxu0 %v1195
      %v1718 = vpop.f32.mrb[0].mxu0
      %v1719 = vadd.f32 %v930, %v1718
      %v1720 = vpop.f32.mrb[0].mxu0
      %1721 = vmatprep.mubr.f32.mxu0 0.0
      %1722 = vmatmul.mubr.f32.gmra.mrb[0].mxu0 %v1197
      %v1723 = vpop.f32.mrb[0].mxu0
      %v1724 = vadd.f32 %v930, %v1723
      %v1725 = vpop.f32.mrb[0].mxu0
      %1726 = vmatprep.mubr.f32.mxu0 0.0
      %1727 = vmatmul.mubr.f32.gmra.mrb[0].mxu0 %v1199
      %v1728 = vpop.f32.mrb[0].mxu0
      %v1729 = vadd.f32 %v930, %v1728
      %v1730 = vpop.f32.mrb[0].mxu0
      %1731 = vmatprep.mubr.f32.mxu0 0.0
      %1732 = vmatmul.mubr.f32.gmra.mrb[0].mxu0 %v1201
      %v1733 = vpop.f32.mrb[0].mxu0
      %v1734 = vadd.f32 %v930, %v1733
      %v1735 = vpop.f32.mrb[0].mxu0
      %1736 = vmatprep.mubr.f32.mxu0 0.0
      %1737 = vmatmul.mubr.f32.gmra.mrb[0].mxu0 %v1203
      %v1738 = vpop.f32.mrb[0].mxu0
      %v1739 = vadd.f32 %v930, %v1738
      %v1740 = vpop.f32.mrb[0].mxu0
      %1741 = vmatprep.mubr.f32.mxu0 0.0
      %1742 = vmatmul.mubr.f32.gmra.mrb[0].mxu0 %v1205
      %v1743 = vpop.f32.mrb[0].mxu0
      %v1744 = vadd.f32 %v930, %v1743
      %v1745 = vpop.f32.mrb[0].mxu0
      %1746 = vmatprep.mubr.f32.mxu0 0.0
      %1747 = vmatmul.mubr.f32.gmra.mrb[0].mxu0 %v1207
      %v1748 = vpop.f32.mrb[0].mxu0
      %v1749 = vadd.f32 %v930, %v1748
      %v1750 = vpop.f32.mrb[0].mxu0
      %1751 = vmatprep.mubr.f32.mxu0 0.0
      %1752 = vmatmul.mubr.f32.gmra.mrb[0].mxu0 %v1613
      %v1753 = vpop.f32.mrb[0].mxu0
      %v1754 = vadd.f32 %v930, %v1753
      %v1755 = vpop.f32.mrb[0].mxu0
      %1756 = vmatprep.mubr.f32.mxu0 0.0
      %1757 = vmatmul.mubr.f32.gmra.mrb[0].mxu0 %v1615
      %v1758 = vpop.f32.mrb[0].mxu0
      %v1759 = vadd.f32 %v930, %v1758
      %v1760 = vpop.f32.mrb[0].mxu0
      %1761 = vdwg.mxu0
      %1778 = vrot.lane.b32.xlu0 %v1684, 4
      %v1779 = vpop.permute.xlu0 %1778
      %1780 = vrot.lane.b32.xlu0 %v1689, 4
      %v1781 = vpop.permute.xlu0 %1780
      %1782 = vrot.lane.b32.xlu0 %v1694, 4
      %v1783 = vpop.permute.xlu0 %1782
      %1784 = vrot.lane.b32.xlu0 %v1699, 4
      %v1785 = vpop.permute.xlu0 %1784
      %1786 = vrot.lane.b32.xlu0 %v1704, 4
      %v1787 = vpop.permute.xlu0 %1786
      %1788 = vrot.lane.b32.xlu0 %v1709, 4
      %v1789 = vpop.permute.xlu0 %1788
      %1790 = vrot.lane.b32.xlu0 %v1714, 4
      %v1791 = vpop.permute.xlu0 %1790
      %1792 = vrot.lane.b32.xlu0 %v1719, 4
      %v1793 = vpop.permute.xlu0 %1792
      %1794 = vrot.lane.b32.xlu0 %v1724, 4
      %v1795 = vpop.permute.xlu0 %1794
      %1796 = vrot.lane.b32.xlu0 %v1729, 4
      %v1797 = vpop.permute.xlu0 %1796
      %1798 = vrot.lane.b32.xlu0 %v1734, 4
      %v1799 = vpop.permute.xlu0 %1798
      %1800 = vrot.lane.b32.xlu0 %v1739, 4
      %v1801 = vpop.permute.xlu0 %1800
      %1802 = vrot.lane.b32.xlu0 %v1744, 4
      %v1803 = vpop.permute.xlu0 %1802
      %1804 = vrot.lane.b32.xlu0 %v1749, 4
      %v1805 = vpop.permute.xlu0 %1804
      %1806 = vrot.lane.b32.xlu0 %v1754, 4
      %v1807 = vpop.permute.xlu0 %1806
      %1808 = vrot.lane.b32.xlu0 %v1759, 4
      %v1809 = vpop.permute.xlu0 %1808
      %v1826 = vsel %vm758, %v1526, %v1779
      %v1827 = vsel %vm758, %v1531, %v1781
      %v1828 = vsel %vm758, %v1536, %v1783
      %v1829 = vsel %vm758, %v1541, %v1785
      %v1830 = vsel %vm758, %v1546, %v1787
      %v1831 = vsel %vm758, %v1551, %v1789
      %v1832 = vsel %vm758, %v1556, %v1791
      %v1833 = vsel %vm758, %v1561, %v1793
      %v1834 = vsel %vm758, %v1566, %v1795
      %v1835 = vsel %vm758, %v1571, %v1797
      %v1836 = vsel %vm758, %v1576, %v1799
      %v1837 = vsel %vm758, %v1581, %v1801
      %v1838 = vsel %vm758, %v1586, %v1803
      %v1839 = vsel %vm758, %v1591, %v1805
      %v1840 = vsel %vm758, %v1596, %v1807
      %v1841 = vsel %vm758, %v1601, %v1809
      %s1842 = scalar_lea.vmem %s391, 16
      %1843 = vst.msk [vmem:[%s1842] sm:$0xff] %vm777, %v1826
      %1844 = vst.msk [vmem:[%s1842 + $0x8] sm:$0xff] %vm777, %v1827
      %1845 = vst.msk [vmem:[%s1842 + $0x20] sm:$0xff] %vm777, %v1828
      %1846 = vst.msk [vmem:[%s1842 + $0x28] sm:$0xff] %vm777, %v1829
      %1847 = vst.msk [vmem:[%s1842 + $0x40] sm:$0xff] %vm777, %v1830
      %1848 = vst.msk [vmem:[%s1842 + $0x48] sm:$0xff] %vm777, %v1831
      %1849 = vst.msk [vmem:[%s1842 + $0x60] sm:$0xff] %vm777, %v1832
      %1850 = vst.msk [vmem:[%s1842 + $0x68] sm:$0xff] %vm777, %v1833
      %1851 = vst.msk [vmem:[%s1842 + $0x80] sm:$0xff] %vm777, %v1834
      %1852 = vst.msk [vmem:[%s1842 + $0x88] sm:$0xff] %vm777, %v1835
      %1853 = vst.msk [vmem:[%s1842 + $0xa0] sm:$0xff] %vm777, %v1836
      %1854 = vst.msk [vmem:[%s1842 + $0xa8] sm:$0xff] %vm777, %v1837
      %1855 = vst.msk [vmem:[%s1842 + $0xc0] sm:$0xff] %vm777, %v1838
      %1856 = vst.msk [vmem:[%s1842 + $0xc8] sm:$0xff] %vm777, %v1839
      %1857 = vst.msk [vmem:[%s1842 + $0xe0] sm:$0xff] %vm777, %v1840
      %1858 = vst.msk [vmem:[%s1842 + $0xe8] sm:$0xff] %vm777, %v1841
      %s1859 = smul.u32 8, %s21
      %p1860 = scmp.lt.s32.totalorder %s20, 1
      %s1861 = scalar_select %p1860, %s20, 1
      %p1862 = scmp.lt.s32.totalorder %s1859, 15
      %s1863 = scalar_select %p1862, %s1859, 15
      %s1864 = smul.addr %s1863, 4
      %s1865 = smul.addr %s1861, 64
      %s1866 = sadd.s32 %s1864, %s1865
      %s1867 = smul.addr %s1866, 8
      %s1868 = scalar_lea.vmem %s5, %s1867
      // Predicated region
      $region41: #{a_call__.1} parent=39 // pred_check
        %p1869 = pneg %p190
      $region42: #{a_call__.1} parent=39 // pred_check_branch
        %1871 = sbr.rel (%p1869) target = $region44
      $region43: #{a_call__.1} parent=39 // pred_region
        %s1872 = smul.u32 8, %s21
      $region44: #{a_call__.1} parent=39 // pred_fallthru
        _
    $region40: #{a_call__.1} parent=5 // pred_fallthru
      _
    %p1873 = scmp.le.s32.totalorder 2, %s11
    // Predicated region
    $region45: #{a_call__.1} parent=5 // pred_check
      %p1874 = pneg %p1873
    $region46: #{a_call__.1} parent=5 // pred_check_branch
      %1876 = sbr.rel (%p1874) target = $region48
    $region47: #{a_call__.1} parent=5 // pred_region
      %s1877 = ssub.s32 %s11, 2
      // Predicated region
      $region49: #{a_call__.1} parent=47 // pred_check
        %p1878 = pneg %p196
      $region50: #{a_call__.1} parent=47 // pred_check_branch
        %1880 = sbr.rel (%p1878) target = $region52
      $region51: #{a_call__.1} parent=47 // pred_region
        %s1881 = smul.u32 8, %s23
        %p1882 = scmp.lt.s32.totalorder %s22, 1
        %s1883 = scalar_select %p1882, %s22, 1
        %p1884 = scmp.lt.s32.totalorder %s1881, 15
        %s1885 = scalar_select %p1884, %s1881, 15
        %s1886 = smul.addr %s1885, 4
        %s1887 = smul.addr %s1883, 64
        %s1888 = sadd.s32 %s1886, %s1887
        %s1889 = smul.addr %s1888, 8
        %s1890 = scalar_lea.vmem %s5, %s1889
      $region52: #{a_call__.1} parent=47 // pred_fallthru
        _
    $region48: #{a_call__.1} parent=5 // pred_fallthru
      _
  $region6: #{a_call__.1} parent=0 // loop_footer
    %s15 = sadd.s32 1, %s11
  $region7: #{a_call__.1} parent=0 // loop_footer_branch
    %10 = sbr.rel target = $region3
  $region8: #{a_call__.1} parent=0 // loop_exit
    _

</llo_original>
